<compile_context>
chip_gen: v6e
topology: v6e:2x2x1
jax: 0.10.0
libtpu: 0.0.40
codegen_flags: <defaults>
</compile_context>

<pallas_src>
import jax
import jax.numpy as jnp
from jax import lax
from jax.experimental import pallas as pl
from jax.experimental.pallas import tpu as pltpu


# ----------------------------------------------------------------------------
# Pallas kernel: whole ConvLSTM recurrence + linear head in one invocation
# ----------------------------------------------------------------------------
def convlstm_kernel(xw_ref, wx_ref, wh_ref, bconv_ref, wlin_ref, blin_ref,
                    out_ref, xg_scr):
    # xw_ref   : (T*BT, K*C)  bf16  pre-windowed x, time-major rows (row = t*BT + b)
    # wx_ref   : (K*C, 4*GP)  bf16  x-part of the folded conv (all K positions fused)
    # wh_ref   : (GP, 4*GP)   bf16  h-part of the folded conv (pad rows/cols zero)
    # bconv_ref: (1, 4*GP)    f32   conv bias (gate-padded)
    # wlin_ref : (1, GP)      f32   head weight, nonzero only on h[:, -1, :] columns
    # blin_ref : (1, 1)       f32   head bias
    # out_ref  : (BT, 1)      f32
    # xg_scr   : (T*BT, 4*GP) bf16  per-step x contribution to the gates
    bt = out_ref.shape[0]
    GP = wh_ref.shape[0]
    T = xg_scr.shape[0] // bt

    # ---- hoist the x-part of the conv out of the recurrence -----------------
    # One MXU pass for all T steps and all K window positions, accumulated in
    # f32 and written straight into the bf16 scratch (no intermediate copy).
    xg_scr[...] = jnp.dot(
        xw_ref[...], wx_ref[...],
        preferred_element_type=jnp.float32).astype(xg_scr.dtype)

    # Per-gate conv bias slices (tiny, loop-invariant -> hoisted).
    b_gate = [bconv_ref[:, g * GP:(g + 1) * GP] for g in range(4)]

    # ---- sequential recurrence: only the h-matmuls are on the critical path --
    def step(t, carry):
        h, c = carry                                   # f32 (bt, GP) carries
        hb = h.astype(jnp.bfloat16)                    # bf16 MXU operand
        row = pl.multiple_of(t * bt, 8)                # sublane-aligned row start

        def pre(gate):                                 # per-gate pre-activation
            lo = gate * GP
            xg = xg_scr[pl.ds(row, bt), lo:lo + GP].astype(jnp.float32)
            hw = jnp.dot(hb, wh_ref[:, lo:lo + GP],
                         preferred_element_type=jnp.float32)
            return xg + b_gate[gate] + hw

        # Combine gates as soon as they are produced to cap live vregs and let
        # EUP sigmoid/tanh of gate k overlap the MXU push of gate k+1.
        i = jax.nn.sigmoid(pre(0))
        g = jnp.tanh(pre(3))
        c_new = i * g
        f = jax.nn.sigmoid(pre(1))
        c_new = f * c + c_new
        o = jax.nn.sigmoid(pre(2))
        h_new = o * jnp.tanh(c_new)
        return h_new, c_new

    h0 = jnp.zeros((bt, GP), jnp.float32)
    c0 = jnp.zeros((bt, GP), jnp.float32)
    unroll = True if T <= 16 else 4                    # bound code size / spills
    h_last, _ = lax.fori_loop(0, T, step, (h0, c0), unroll=unroll)

    # ---- linear head: VPU multiply + lane reduction (no degenerate matmul) ---
    out = jnp.sum(h_last * wlin_ref[...], axis=-1, keepdims=True) + blin_ref[...]
    out_ref[...] = out.astype(out_ref.dtype)


# ----------------------------------------------------------------------------
# Glue: fold PyTorch Conv1d weights (4H, C+H, K) into lane-aligned operators
# ----------------------------------------------------------------------------
def build_operators(conv_w, conv_b, lin_w, lin_b, C, H, K, GP):
    """Column layout of all gate-valued operators: col = g*GP + p*H + hc,
    where p = window position, hc = hidden channel; columns [K*H, GP) of every
    gate block are zero so the kernel's gate slices are 128-lane aligned."""
    pad = K // 2
    Cin = C + H
    KH = K * H
    # M[q, ic, p, oc]: contribution of window-input position q, channel ic to
    # conv output position p, output channel oc ('same'-padded Conv1d fold).
    M = jnp.zeros((K, Cin, K, 4 * H), jnp.float32)
    for q in range(K):
        for p in range(K):
            dk = q - p + pad
            if 0 <= dk < K:
                M = M.at[q, :, p, :].set(conv_w[:, :, dk].T)
    Mr = M.reshape(K, Cin, K, 4, H).transpose(0, 1, 3, 2, 4)     # (q, ic, g, p, hc)
    Mp = jnp.pad(Mr.reshape(K, Cin, 4, KH),
                 ((0, 0), (0, 0), (0, 0), (0, GP - KH)))         # pad gate stride
    Mp = Mp.reshape(K, Cin, 4 * GP)

    # MXU operands in bf16 (f32 accumulation happens in-kernel).
    Wx = Mp[:, :C, :].reshape(K * C, 4 * GP).astype(jnp.bfloat16)  # row = q*C + c
    Wh = jnp.pad(Mp[:, C:, :].reshape(KH, 4 * GP),                 # rows: q*H + hc
                 ((0, GP - KH), (0, 0))).astype(jnp.bfloat16)      # (GP, 4*GP)
    bconv = jnp.pad(
        jnp.broadcast_to(conv_b.reshape(4, 1, H), (4, K, H)).reshape(4, KH),
        ((0, 0), (0, GP - KH))).reshape(1, 4 * GP).astype(jnp.float32)
    # head reads h[:, -1, :]  -> state columns (K-1)*H .. K*H
    wlin = jnp.zeros((1, GP), jnp.float32).at[0, (K - 1) * H:KH].set(
        lin_w.reshape(H).astype(jnp.float32))
    blin = lin_b.reshape(1, 1).astype(jnp.float32)
    return Wx, Wh, bconv, wlin, blin


def _pick_batch_tile(b_pad8, requested):
    """Generation-aware batch tile.
      * v5e: 128-wide MXU -> BT=128 already fills M.
      * v6e/v7x: 256-wide MXU -> raise BT to 256 when the batch is large enough.
      * v7x: 2 TensorCores -> keep >= 2 batch tiles so the "parallel" grid axis
        feeds both cores (two 128/256-row tiles beat one big one)."""
    kind = ""
    try:
        kind = jax.devices()[0].device_kind.lower()
    except Exception:
        pass
    wide_mxu = "v5" not in kind
    two_cores = "v7" in kind

    bt = min(requested, b_pad8)
    if wide_mxu and b_pad8 >= (512 if two_cores else 256):
        bt = max(bt, 256)
    if two_cores:
        half = (b_pad8 // 2 // 8) * 8          # largest tile that still gives 2 tiles
        if half >= 8:
            bt = min(bt, half)
    bt = max(8, (min(bt, b_pad8) // 8) * 8)    # multiple of 8, >= one sublane group
    return bt


def conv_lstm_forward_pallas(x, conv_w, conv_b, lin_w, lin_b, K, H,
                             batch_tile=128):
    B, T_in, C = x.shape
    T = T_in - K + 1
    KH = K * H
    GP = ((KH + 127) // 128) * 128            # lane-aligned gate stride
    G4 = 4 * GP
    KC = K * C

    Wx, Wh, bconv, wlin, blin = build_operators(conv_w, conv_b, lin_w, lin_b,
                                                C, H, K, GP)

    # Pad batch to a full sublane group, pick the tile, then pad to a tile multiple.
    B_pad8 = max(8, -(-B // 8) * 8)
    BT = _pick_batch_tile(B_pad8, batch_tile)
    B_pad = -(-B_pad8 // BT) * BT
    n_bt = B_pad // BT

    # Host-side K-window fusion: xw[b, t, q*C + c] = x[b, t+q, c]  (tiny data),
    # then lay each batch tile out time-major (row = t*BT + b), cast to bf16.
    x_p = jnp.zeros((B_pad, T_in, C), jnp.float32).at[:B].set(x.astype(jnp.float32))
    xw = jnp.stack([x_p[:, q:q + T, :] for q in range(K)], axis=2)   # (B_pad, T, K, C)
    xw = xw.reshape(B_pad, T, KC).astype(jnp.bfloat16)
    x_tiles = (xw.reshape(n_bt, BT, T, KC)
                 .transpose(0, 2, 1, 3)
                 .reshape(n_bt, T * BT, KC))

    # VMEM budget: bf16 scratch + double-buffered tiles + weights + headroom,
    # capped so it also fits v7x's 64 MiB physical VMEM.
    scratch_bytes = T * BT * G4 * 2
    in_tile_bytes = T * BT * KC * 2
    weight_bytes = (KC * G4 + GP * G4) * 2 + (G4 + GP + 1) * 4
    need = scratch_bytes + 2 * (in_tile_bytes + BT * 4) + 2 * weight_bytes
    vmem_limit = int(min(max(need + (8 << 20), 16 << 20), 56 << 20))
    # TODO(synk): if scratch alone exceeds the cap (very large T*BT), chunk T.

    out = pl.pallas_call(
        convlstm_kernel,
        out_shape=jax.ShapeDtypeStruct((B_pad, 1), jnp.float32),
        grid=(n_bt,),                         # recurrence is fully in-kernel
        in_specs=[
            pl.BlockSpec((None, T * BT, KC), lambda b: (b, 0, 0)),  # x windows
            pl.BlockSpec((KC, G4), lambda b: (0, 0)),               # Wx
            pl.BlockSpec((GP, G4), lambda b: (0, 0)),               # Wh
            pl.BlockSpec((1, G4), lambda b: (0, 0)),                # conv bias
            pl.BlockSpec((1, GP), lambda b: (0, 0)),                # head weight
            pl.BlockSpec((1, 1), lambda b: (0, 0)),                 # head bias
        ],
        out_specs=pl.BlockSpec((BT, 1), lambda b: (b, 0)),
        scratch_shapes=[pltpu.VMEM((T * BT, G4), jnp.bfloat16)],
        compiler_params=pltpu.CompilerParams(
            dimension_semantics=("parallel",),   # batch tiles split across TCs
            vmem_limit_bytes=vmem_limit),
    )(x_tiles, Wx, Wh, bconv, wlin, blin)
    return jnp.squeeze(out[:B])                  # mirrors the module's .squeeze()


# ----------------------------------------------------------------------------
# Pure-JAX f32 reference (direct port of the assumed cell + forward semantics)
# ----------------------------------------------------------------------------
def conv_lstm_forward_ref(x, conv_w, conv_b, lin_w, lin_b, K, H):
    B, T_in, C = x.shape
    pad = K // 2
    T = T_in - K + 1
    h = jnp.zeros((B, K, H), jnp.float32)
    c = jnp.zeros((B, K, H), jnp.float32)
    for t in range(T):
        x_t = x[:, t:t + K, :].astype(jnp.float32)             # (B, K, C)
        comb = jnp.concatenate([x_t, h], axis=-1)              # (B, K, C+H)
        comb_pad = jnp.pad(comb, ((0, 0), (pad, pad), (0, 0)))
        gates = jnp.zeros((B, K, 4 * H), jnp.float32) + conv_b
        for dk in range(K):
            gates = gates + comb_pad[:, dk:dk + K, :] @ conv_w[:, :, dk].T
        i = jax.nn.sigmoid(gates[..., 0 * H:1 * H])
        f = jax.nn.sigmoid(gates[..., 1 * H:2 * H])
        o = jax.nn.sigmoid(gates[..., 2 * H:3 * H])
        g = jnp.tanh(gates[..., 3 * H:4 * H])
        c = f * c + i * g
        h = o * jnp.tanh(c)
    out = h[:, -1, :] @ lin_w.T + lin_b
    return jnp.squeeze(out)


if __name__ == "__main__":
    # synthetic params (mirrors the module __init__ shapes), num_layers = 1
    B, WINLEN, C = 2, 8, 4          # batch, window length, input_dim
    K, H = 3, 32                    # kernel_size, hidden_dim

    key = jax.random.PRNGKey(0)
    k_x, k_w, k_b, k_lw, k_lb = jax.random.split(key, 5)
    x = jax.random.normal(k_x, (B, WINLEN, C), jnp.float32)
    conv_w = 0.1 * jax.random.normal(k_w, (4 * H, C + H, K), jnp.float32)  # Conv1d (OC, IC, K)
    conv_b = 0.1 * jax.random.normal(k_b, (4 * H,), jnp.float32)
    lin_w = 0.1 * jax.random.normal(k_lw, (1, H), jnp.float32)             # Linear(H, 1)
    lin_b = 0.1 * jax.random.normal(k_lb, (1,), jnp.float32)

    out = conv_lstm_forward_pallas(x, conv_w, conv_b, lin_w, lin_b, K, H)
    out = jax.block_until_ready(out)

    ref = conv_lstm_forward_ref(x, conv_w, conv_b, lin_w, lin_b, K, H)
    assert out.shape == ref.shape == (B,)
    # bf16 MXU operands vs. the f32 reference -> loosened tolerance.
    assert jnp.allclose(out, ref, rtol=5e-2, atol=5e-2), (out, ref)
    print("KERNEL_OK")
</pallas_src>

<mosaic_0001>
module attributes {stable_mosaic.version = 11 : i64} {
  func.func @convlstm_kernel(%arg0: i32, %arg1: memref<1x48x12xbf16, #tpu.memory_space<vmem>>, %arg2: memref<12x512xbf16, #tpu.memory_space<vmem>>, %arg3: memref<128x512xbf16, #tpu.memory_space<vmem>>, %arg4: memref<1x512xf32, #tpu.memory_space<vmem>>, %arg5: memref<1x128xf32, #tpu.memory_space<vmem>>, %arg6: memref<1x1xf32, #tpu.memory_space<vmem>>, %arg7: memref<8x1xf32, #tpu.memory_space<vmem>>, %arg8: memref<48x512xbf16, #tpu.memory_space<vmem>>) attributes {dimension_semantics = [#tpu.dimension_semantics<parallel>], iteration_bounds = array<i64: 1>, scalar_prefetch = 0 : i64, scratch_operands = 1 : i64, tpu.core_type = #tpu.core_type<tc>, window_params = [{transform_indices = @transform_0, window_bounds = array<i64: 1, 48, 12>}, {pipeline_mode = #tpu.pipeline_mode<synchronous>, transform_indices = @transform_1, window_bounds = array<i64: 12, 512>}, {pipeline_mode = #tpu.pipeline_mode<synchronous>, transform_indices = @transform_2, window_bounds = array<i64: 128, 512>}, {pipeline_mode = #tpu.pipeline_mode<synchronous>, transform_indices = @transform_3, window_bounds = array<i64: 1, 512>}, {pipeline_mode = #tpu.pipeline_mode<synchronous>, transform_indices = @transform_4, window_bounds = array<i64: 1, 128>}, {pipeline_mode = #tpu.pipeline_mode<synchronous>, transform_indices = @transform_5, window_bounds = array<i64: 1, 1>}, {transform_indices = @transform_6, window_bounds = array<i64: 8, 1>}]} {
    %c0 = arith.constant 0 : index
    %c0_0 = arith.constant 0 : index
    %c0_1 = arith.constant 0 : index
    %0 = vector.load %arg1[%c0, %c0_0, %c0_1] : memref<1x48x12xbf16, #tpu.memory_space<vmem>>, vector<1x48x12xbf16>
    %1 = vector.shape_cast %0 : vector<1x48x12xbf16> to vector<48x12xbf16>
    %c0_2 = arith.constant 0 : index
    %c0_3 = arith.constant 0 : index
    %2 = vector.load %arg2[%c0_2, %c0_3] : memref<12x512xbf16, #tpu.memory_space<vmem>>, vector<12x512xbf16>
    %cst = arith.constant dense<0.000000e+00> : vector<48x512xf32>
    %3 = tpu.matmul %1, %2, %cst {dimension_numbers = #tpu.dot_dimension_numbers<[1], [0], [0], [1], [0, 0, 1, 1], [], []>} : vector<48x12xbf16>, vector<12x512xbf16>, vector<48x512xf32> -> vector<48x512xf32>
    %4 = arith.truncf %3 : vector<48x512xf32> to vector<48x512xbf16>
    %c0_4 = arith.constant 0 : index
    %c0_5 = arith.constant 0 : index
    %5 = vector.load %arg8[%c0_4, %c0_5] : memref<48x512xbf16, #tpu.memory_space<vmem>>, vector<48x512xbf16>
    tpu.vector_store %arg8[%c0_4, %c0_5], %4 {strides = array<i32>} : memref<48x512xbf16, #tpu.memory_space<vmem>>, vector<48x512xbf16>,
    %c0_6 = arith.constant 0 : index
    %c0_7 = arith.constant 0 : index
    %6 = vector.load %arg4[%c0_6, %c0_7] : memref<1x512xf32, #tpu.memory_space<vmem>>, vector<1x128xf32>
    %c0_8 = arith.constant 0 : index
    %c128 = arith.constant 128 : index
    %7 = vector.load %arg4[%c0_8, %c128] : memref<1x512xf32, #tpu.memory_space<vmem>>, vector<1x128xf32>
    %c0_9 = arith.constant 0 : index
    %c256 = arith.constant 256 : index
    %8 = vector.load %arg4[%c0_9, %c256] : memref<1x512xf32, #tpu.memory_space<vmem>>, vector<1x128xf32>
    %c0_10 = arith.constant 0 : index
    %c384 = arith.constant 384 : index
    %9 = vector.load %arg4[%c0_10, %c384] : memref<1x512xf32, #tpu.memory_space<vmem>>, vector<1x128xf32>
    %cst_11 = arith.constant 0.000000e+00 : f32
    %10 = vector.broadcast %cst_11 : f32 to vector<8x128xf32>
    %cst_12 = arith.constant 0.000000e+00 : f32
    %11 = vector.broadcast %cst_12 : f32 to vector<8x128xf32>
    %c0_i32 = arith.constant 0 : i32
    %12 = arith.truncf %10 : vector<8x128xf32> to vector<8x128xbf16>
    %c8_i32 = arith.constant 8 : i32
    %13 = arith.muli %c0_i32, %c8_i32 : i32
    %14 = tpu.assume_multiple %13, 8 : i32
    %15 = arith.index_cast %14 : i32 to index
    %c0_13 = arith.constant 0 : index
    %16 = vector.load %arg8[%15, %c0_13] : memref<48x512xbf16, #tpu.memory_space<vmem>>, vector<8x128xbf16>
    %17 = arith.extf %16 : vector<8x128xbf16> to vector<8x128xf32>
    %c0_14 = arith.constant 0 : index
    %c0_15 = arith.constant 0 : index
    %18 = vector.load %arg3[%c0_14, %c0_15] : memref<128x512xbf16, #tpu.memory_space<vmem>>, vector<128x128xbf16>
    %cst_16 = arith.constant dense<0.000000e+00> : vector<8x128xf32>
    %19 = tpu.matmul %12, %18, %cst_16 {dimension_numbers = #tpu.dot_dimension_numbers<[1], [0], [0], [1], [0, 0, 1, 1], [], []>} : vector<8x128xbf16>, vector<128x128xbf16>, vector<8x128xf32> -> vector<8x128xf32>
    %20 = vector.broadcast %6 : vector<1x128xf32> to vector<8x128xf32>
    %21 = arith.addf %17, %20 : vector<8x128xf32>
    %22 = arith.addf %21, %19 : vector<8x128xf32>
    %23 = arith.negf %22 : vector<8x128xf32>
    %24 = math.exp %23 : vector<8x128xf32>
    %cst_17 = arith.constant 1.000000e+00 : f32
    %25 = vector.broadcast %cst_17 : f32 to vector<8x128xf32>
    %26 = arith.addf %25, %24 : vector<8x128xf32>
    %27 = arith.divf %25, %26 : vector<8x128xf32>
    %28 = arith.index_cast %14 : i32 to index
    %c384_18 = arith.constant 384 : index
    %29 = vector.load %arg8[%28, %c384_18] : memref<48x512xbf16, #tpu.memory_space<vmem>>, vector<8x128xbf16>
    %30 = arith.extf %29 : vector<8x128xbf16> to vector<8x128xf32>
    %c0_19 = arith.constant 0 : index
    %c384_20 = arith.constant 384 : index
    %31 = vector.load %arg3[%c0_19, %c384_20] : memref<128x512xbf16, #tpu.memory_space<vmem>>, vector<128x128xbf16>
    %cst_21 = arith.constant dense<0.000000e+00> : vector<8x128xf32>
    %32 = tpu.matmul %12, %31, %cst_21 {dimension_numbers = #tpu.dot_dimension_numbers<[1], [0], [0], [1], [0, 0, 1, 1], [], []>} : vector<8x128xbf16>, vector<128x128xbf16>, vector<8x128xf32> -> vector<8x128xf32>
    %33 = vector.broadcast %9 : vector<1x128xf32> to vector<8x128xf32>
    %34 = arith.addf %30, %33 : vector<8x128xf32>
    %35 = arith.addf %34, %32 : vector<8x128xf32>
    %36 = math.tanh %35 : vector<8x128xf32>
    %37 = arith.mulf %27, %36 : vector<8x128xf32>
    %38 = arith.index_cast %14 : i32 to index
    %c128_22 = arith.constant 128 : index
    %39 = vector.load %arg8[%38, %c128_22] : memref<48x512xbf16, #tpu.memory_space<vmem>>, vector<8x128xbf16>
    %40 = arith.extf %39 : vector<8x128xbf16> to vector<8x128xf32>
    %c0_23 = arith.constant 0 : index
    %c128_24 = arith.constant 128 : index
    %41 = vector.load %arg3[%c0_23, %c128_24] : memref<128x512xbf16, #tpu.memory_space<vmem>>, vector<128x128xbf16>
    %cst_25 = arith.constant dense<0.000000e+00> : vector<8x128xf32>
    %42 = tpu.matmul %12, %41, %cst_25 {dimension_numbers = #tpu.dot_dimension_numbers<[1], [0], [0], [1], [0, 0, 1, 1], [], []>} : vector<8x128xbf16>, vector<128x128xbf16>, vector<8x128xf32> -> vector<8x128xf32>
    %43 = vector.broadcast %7 : vector<1x128xf32> to vector<8x128xf32>
    %44 = arith.addf %40, %43 : vector<8x128xf32>
    %45 = arith.addf %44, %42 : vector<8x128xf32>
    %46 = arith.negf %45 : vector<8x128xf32>
    %47 = math.exp %46 : vector<8x128xf32>
    %cst_26 = arith.constant 1.000000e+00 : f32
    %48 = vector.broadcast %cst_26 : f32 to vector<8x128xf32>
    %49 = arith.addf %48, %47 : vector<8x128xf32>
    %50 = arith.divf %48, %49 : vector<8x128xf32>
    %51 = arith.mulf %50, %11 : vector<8x128xf32>
    %52 = arith.addf %51, %37 : vector<8x128xf32>
    %53 = arith.index_cast %14 : i32 to index
    %c256_27 = arith.constant 256 : index
    %54 = vector.load %arg8[%53, %c256_27] : memref<48x512xbf16, #tpu.memory_space<vmem>>, vector<8x128xbf16>
    %55 = arith.extf %54 : vector<8x128xbf16> to vector<8x128xf32>
    %c0_28 = arith.constant 0 : index
    %c256_29 = arith.constant 256 : index
    %56 = vector.load %arg3[%c0_28, %c256_29] : memref<128x512xbf16, #tpu.memory_space<vmem>>, vector<128x128xbf16>
    %cst_30 = arith.constant dense<0.000000e+00> : vector<8x128xf32>
    %57 = tpu.matmul %12, %56, %cst_30 {dimension_numbers = #tpu.dot_dimension_numbers<[1], [0], [0], [1], [0, 0, 1, 1], [], []>} : vector<8x128xbf16>, vector<128x128xbf16>, vector<8x128xf32> -> vector<8x128xf32>
    %58 = vector.broadcast %8 : vector<1x128xf32> to vector<8x128xf32>
    %59 = arith.addf %55, %58 : vector<8x128xf32>
    %60 = arith.addf %59, %57 : vector<8x128xf32>
    %61 = arith.negf %60 : vector<8x128xf32>
    %62 = math.exp %61 : vector<8x128xf32>
    %cst_31 = arith.constant 1.000000e+00 : f32
    %63 = vector.broadcast %cst_31 : f32 to vector<8x128xf32>
    %64 = arith.addf %63, %62 : vector<8x128xf32>
    %65 = arith.divf %63, %64 : vector<8x128xf32>
    %66 = math.tanh %52 : vector<8x128xf32>
    %67 = arith.mulf %65, %66 : vector<8x128xf32>
    %c1_i32 = arith.constant 1 : i32
    %68 = arith.truncf %67 : vector<8x128xf32> to vector<8x128xbf16>
    %c8_i32_32 = arith.constant 8 : i32
    %69 = arith.muli %c1_i32, %c8_i32_32 : i32
    %70 = tpu.assume_multiple %69, 8 : i32
    %71 = arith.index_cast %70 : i32 to index
    %c0_33 = arith.constant 0 : index
    %72 = vector.load %arg8[%71, %c0_33] : memref<48x512xbf16, #tpu.memory_space<vmem>>, vector<8x128xbf16>
    %73 = arith.extf %72 : vector<8x128xbf16> to vector<8x128xf32>
    %c0_34 = arith.constant 0 : index
    %c0_35 = arith.constant 0 : index
    %74 = vector.load %arg3[%c0_34, %c0_35] : memref<128x512xbf16, #tpu.memory_space<vmem>>, vector<128x128xbf16>
    %cst_36 = arith.constant dense<0.000000e+00> : vector<8x128xf32>
    %75 = tpu.matmul %68, %74, %cst_36 {dimension_numbers = #tpu.dot_dimension_numbers<[1], [0], [0], [1], [0, 0, 1, 1], [], []>} : vector<8x128xbf16>, vector<128x128xbf16>, vector<8x128xf32> -> vector<8x128xf32>
    %76 = vector.broadcast %6 : vector<1x128xf32> to vector<8x128xf32>
    %77 = arith.addf %73, %76 : vector<8x128xf32>
    %78 = arith.addf %77, %75 : vector<8x128xf32>
    %79 = arith.negf %78 : vector<8x128xf32>
    %80 = math.exp %79 : vector<8x128xf32>
    %cst_37 = arith.constant 1.000000e+00 : f32
    %81 = vector.broadcast %cst_37 : f32 to vector<8x128xf32>
    %82 = arith.addf %81, %80 : vector<8x128xf32>
    %83 = arith.divf %81, %82 : vector<8x128xf32>
    %84 = arith.index_cast %70 : i32 to index
    %c384_38 = arith.constant 384 : index
    %85 = vector.load %arg8[%84, %c384_38] : memref<48x512xbf16, #tpu.memory_space<vmem>>, vector<8x128xbf16>
    %86 = arith.extf %85 : vector<8x128xbf16> to vector<8x128xf32>
    %c0_39 = arith.constant 0 : index
    %c384_40 = arith.constant 384 : index
    %87 = vector.load %arg3[%c0_39, %c384_40] : memref<128x512xbf16, #tpu.memory_space<vmem>>, vector<128x128xbf16>
    %cst_41 = arith.constant dense<0.000000e+00> : vector<8x128xf32>
    %88 = tpu.matmul %68, %87, %cst_41 {dimension_numbers = #tpu.dot_dimension_numbers<[1], [0], [0], [1], [0, 0, 1, 1], [], []>} : vector<8x128xbf16>, vector<128x128xbf16>, vector<8x128xf32> -> vector<8x128xf32>
    %89 = vector.broadcast %9 : vector<1x128xf32> to vector<8x128xf32>
    %90 = arith.addf %86, %89 : vector<8x128xf32>
    %91 = arith.addf %90, %88 : vector<8x128xf32>
    %92 = math.tanh %91 : vector<8x128xf32>
    %93 = arith.mulf %83, %92 : vector<8x128xf32>
    %94 = arith.index_cast %70 : i32 to index
    %c128_42 = arith.constant 128 : index
    %95 = vector.load %arg8[%94, %c128_42] : memref<48x512xbf16, #tpu.memory_space<vmem>>, vector<8x128xbf16>
    %96 = arith.extf %95 : vector<8x128xbf16> to vector<8x128xf32>
    %c0_43 = arith.constant 0 : index
    %c128_44 = arith.constant 128 : index
    %97 = vector.load %arg3[%c0_43, %c128_44] : memref<128x512xbf16, #tpu.memory_space<vmem>>, vector<128x128xbf16>
    %cst_45 = arith.constant dense<0.000000e+00> : vector<8x128xf32>
    %98 = tpu.matmul %68, %97, %cst_45 {dimension_numbers = #tpu.dot_dimension_numbers<[1], [0], [0], [1], [0, 0, 1, 1], [], []>} : vector<8x128xbf16>, vector<128x128xbf16>, vector<8x128xf32> -> vector<8x128xf32>
    %99 = vector.broadcast %7 : vector<1x128xf32> to vector<8x128xf32>
    %100 = arith.addf %96, %99 : vector<8x128xf32>
    %101 = arith.addf %100, %98 : vector<8x128xf32>
    %102 = arith.negf %101 : vector<8x128xf32>
    %103 = math.exp %102 : vector<8x128xf32>
    %cst_46 = arith.constant 1.000000e+00 : f32
    %104 = vector.broadcast %cst_46 : f32 to vector<8x128xf32>
    %105 = arith.addf %104, %103 : vector<8x128xf32>
    %106 = arith.divf %104, %105 : vector<8x128xf32>
    %107 = arith.mulf %106, %52 : vector<8x128xf32>
    %108 = arith.addf %107, %93 : vector<8x128xf32>
    %109 = arith.index_cast %70 : i32 to index
    %c256_47 = arith.constant 256 : index
    %110 = vector.load %arg8[%109, %c256_47] : memref<48x512xbf16, #tpu.memory_space<vmem>>, vector<8x128xbf16>
    %111 = arith.extf %110 : vector<8x128xbf16> to vector<8x128xf32>
    %c0_48 = arith.constant 0 : index
    %c256_49 = arith.constant 256 : index
    %112 = vector.load %arg3[%c0_48, %c256_49] : memref<128x512xbf16, #tpu.memory_space<vmem>>, vector<128x128xbf16>
    %cst_50 = arith.constant dense<0.000000e+00> : vector<8x128xf32>
    %113 = tpu.matmul %68, %112, %cst_50 {dimension_numbers = #tpu.dot_dimension_numbers<[1], [0], [0], [1], [0, 0, 1, 1], [], []>} : vector<8x128xbf16>, vector<128x128xbf16>, vector<8x128xf32> -> vector<8x128xf32>
    %114 = vector.broadcast %8 : vector<1x128xf32> to vector<8x128xf32>
    %115 = arith.addf %111, %114 : vector<8x128xf32>
    %116 = arith.addf %115, %113 : vector<8x128xf32>
    %117 = arith.negf %116 : vector<8x128xf32>
    %118 = math.exp %117 : vector<8x128xf32>
    %cst_51 = arith.constant 1.000000e+00 : f32
    %119 = vector.broadcast %cst_51 : f32 to vector<8x128xf32>
    %120 = arith.addf %119, %118 : vector<8x128xf32>
    %121 = arith.divf %119, %120 : vector<8x128xf32>
    %122 = math.tanh %108 : vector<8x128xf32>
    %123 = arith.mulf %121, %122 : vector<8x128xf32>
    %c2_i32 = arith.constant 2 : i32
    %124 = arith.truncf %123 : vector<8x128xf32> to vector<8x128xbf16>
    %c8_i32_52 = arith.constant 8 : i32
    %125 = arith.muli %c2_i32, %c8_i32_52 : i32
    %126 = tpu.assume_multiple %125, 8 : i32
    %127 = arith.index_cast %126 : i32 to index
    %c0_53 = arith.constant 0 : index
    %128 = vector.load %arg8[%127, %c0_53] : memref<48x512xbf16, #tpu.memory_space<vmem>>, vector<8x128xbf16>
    %129 = arith.extf %128 : vector<8x128xbf16> to vector<8x128xf32>
    %c0_54 = arith.constant 0 : index
    %c0_55 = arith.constant 0 : index
    %130 = vector.load %arg3[%c0_54, %c0_55] : memref<128x512xbf16, #tpu.memory_space<vmem>>, vector<128x128xbf16>
    %cst_56 = arith.constant dense<0.000000e+00> : vector<8x128xf32>
    %131 = tpu.matmul %124, %130, %cst_56 {dimension_numbers = #tpu.dot_dimension_numbers<[1], [0], [0], [1], [0, 0, 1, 1], [], []>} : vector<8x128xbf16>, vector<128x128xbf16>, vector<8x128xf32> -> vector<8x128xf32>
    %132 = vector.broadcast %6 : vector<1x128xf32> to vector<8x128xf32>
    %133 = arith.addf %129, %132 : vector<8x128xf32>
    %134 = arith.addf %133, %131 : vector<8x128xf32>
    %135 = arith.negf %134 : vector<8x128xf32>
    %136 = math.exp %135 : vector<8x128xf32>
    %cst_57 = arith.constant 1.000000e+00 : f32
    %137 = vector.broadcast %cst_57 : f32 to vector<8x128xf32>
    %138 = arith.addf %137, %136 : vector<8x128xf32>
    %139 = arith.divf %137, %138 : vector<8x128xf32>
    %140 = arith.index_cast %126 : i32 to index
    %c384_58 = arith.constant 384 : index
    %141 = vector.load %arg8[%140, %c384_58] : memref<48x512xbf16, #tpu.memory_space<vmem>>, vector<8x128xbf16>
    %142 = arith.extf %141 : vector<8x128xbf16> to vector<8x128xf32>
    %c0_59 = arith.constant 0 : index
    %c384_60 = arith.constant 384 : index
    %143 = vector.load %arg3[%c0_59, %c384_60] : memref<128x512xbf16, #tpu.memory_space<vmem>>, vector<128x128xbf16>
    %cst_61 = arith.constant dense<0.000000e+00> : vector<8x128xf32>
    %144 = tpu.matmul %124, %143, %cst_61 {dimension_numbers = #tpu.dot_dimension_numbers<[1], [0], [0], [1], [0, 0, 1, 1], [], []>} : vector<8x128xbf16>, vector<128x128xbf16>, vector<8x128xf32> -> vector<8x128xf32>
    %145 = vector.broadcast %9 : vector<1x128xf32> to vector<8x128xf32>
    %146 = arith.addf %142, %145 : vector<8x128xf32>
    %147 = arith.addf %146, %144 : vector<8x128xf32>
    %148 = math.tanh %147 : vector<8x128xf32>
    %149 = arith.mulf %139, %148 : vector<8x128xf32>
    %150 = arith.index_cast %126 : i32 to index
    %c128_62 = arith.constant 128 : index
    %151 = vector.load %arg8[%150, %c128_62] : memref<48x512xbf16, #tpu.memory_space<vmem>>, vector<8x128xbf16>
    %152 = arith.extf %151 : vector<8x128xbf16> to vector<8x128xf32>
    %c0_63 = arith.constant 0 : index
    %c128_64 = arith.constant 128 : index
    %153 = vector.load %arg3[%c0_63, %c128_64] : memref<128x512xbf16, #tpu.memory_space<vmem>>, vector<128x128xbf16>
    %cst_65 = arith.constant dense<0.000000e+00> : vector<8x128xf32>
    %154 = tpu.matmul %124, %153, %cst_65 {dimension_numbers = #tpu.dot_dimension_numbers<[1], [0], [0], [1], [0, 0, 1, 1], [], []>} : vector<8x128xbf16>, vector<128x128xbf16>, vector<8x128xf32> -> vector<8x128xf32>
    %155 = vector.broadcast %7 : vector<1x128xf32> to vector<8x128xf32>
    %156 = arith.addf %152, %155 : vector<8x128xf32>
    %157 = arith.addf %156, %154 : vector<8x128xf32>
    %158 = arith.negf %157 : vector<8x128xf32>
    %159 = math.exp %158 : vector<8x128xf32>
    %cst_66 = arith.constant 1.000000e+00 : f32
    %160 = vector.broadcast %cst_66 : f32 to vector<8x128xf32>
    %161 = arith.addf %160, %159 : vector<8x128xf32>
    %162 = arith.divf %160, %161 : vector<8x128xf32>
    %163 = arith.mulf %162, %108 : vector<8x128xf32>
    %164 = arith.addf %163, %149 : vector<8x128xf32>
    %165 = arith.index_cast %126 : i32 to index
    %c256_67 = arith.constant 256 : index
    %166 = vector.load %arg8[%165, %c256_67] : memref<48x512xbf16, #tpu.memory_space<vmem>>, vector<8x128xbf16>
    %167 = arith.extf %166 : vector<8x128xbf16> to vector<8x128xf32>
    %c0_68 = arith.constant 0 : index
    %c256_69 = arith.constant 256 : index
    %168 = vector.load %arg3[%c0_68, %c256_69] : memref<128x512xbf16, #tpu.memory_space<vmem>>, vector<128x128xbf16>
    %cst_70 = arith.constant dense<0.000000e+00> : vector<8x128xf32>
    %169 = tpu.matmul %124, %168, %cst_70 {dimension_numbers = #tpu.dot_dimension_numbers<[1], [0], [0], [1], [0, 0, 1, 1], [], []>} : vector<8x128xbf16>, vector<128x128xbf16>, vector<8x128xf32> -> vector<8x128xf32>
    %170 = vector.broadcast %8 : vector<1x128xf32> to vector<8x128xf32>
    %171 = arith.addf %167, %170 : vector<8x128xf32>
    %172 = arith.addf %171, %169 : vector<8x128xf32>
    %173 = arith.negf %172 : vector<8x128xf32>
    %174 = math.exp %173 : vector<8x128xf32>
    %cst_71 = arith.constant 1.000000e+00 : f32
    %175 = vector.broadcast %cst_71 : f32 to vector<8x128xf32>
    %176 = arith.addf %175, %174 : vector<8x128xf32>
    %177 = arith.divf %175, %176 : vector<8x128xf32>
    %178 = math.tanh %164 : vector<8x128xf32>
    %179 = arith.mulf %177, %178 : vector<8x128xf32>
    %c3_i32 = arith.constant 3 : i32
    %180 = arith.truncf %179 : vector<8x128xf32> to vector<8x128xbf16>
    %c8_i32_72 = arith.constant 8 : i32
    %181 = arith.muli %c3_i32, %c8_i32_72 : i32
    %182 = tpu.assume_multiple %181, 8 : i32
    %183 = arith.index_cast %182 : i32 to index
    %c0_73 = arith.constant 0 : index
    %184 = vector.load %arg8[%183, %c0_73] : memref<48x512xbf16, #tpu.memory_space<vmem>>, vector<8x128xbf16>
    %185 = arith.extf %184 : vector<8x128xbf16> to vector<8x128xf32>
    %c0_74 = arith.constant 0 : index
    %c0_75 = arith.constant 0 : index
    %186 = vector.load %arg3[%c0_74, %c0_75] : memref<128x512xbf16, #tpu.memory_space<vmem>>, vector<128x128xbf16>
    %cst_76 = arith.constant dense<0.000000e+00> : vector<8x128xf32>
    %187 = tpu.matmul %180, %186, %cst_76 {dimension_numbers = #tpu.dot_dimension_numbers<[1], [0], [0], [1], [0, 0, 1, 1], [], []>} : vector<8x128xbf16>, vector<128x128xbf16>, vector<8x128xf32> -> vector<8x128xf32>
    %188 = vector.broadcast %6 : vector<1x128xf32> to vector<8x128xf32>
    %189 = arith.addf %185, %188 : vector<8x128xf32>
    %190 = arith.addf %189, %187 : vector<8x128xf32>
    %191 = arith.negf %190 : vector<8x128xf32>
    %192 = math.exp %191 : vector<8x128xf32>
    %cst_77 = arith.constant 1.000000e+00 : f32
    %193 = vector.broadcast %cst_77 : f32 to vector<8x128xf32>
    %194 = arith.addf %193, %192 : vector<8x128xf32>
    %195 = arith.divf %193, %194 : vector<8x128xf32>
    %196 = arith.index_cast %182 : i32 to index
    %c384_78 = arith.constant 384 : index
    %197 = vector.load %arg8[%196, %c384_78] : memref<48x512xbf16, #tpu.memory_space<vmem>>, vector<8x128xbf16>
    %198 = arith.extf %197 : vector<8x128xbf16> to vector<8x128xf32>
    %c0_79 = arith.constant 0 : index
    %c384_80 = arith.constant 384 : index
    %199 = vector.load %arg3[%c0_79, %c384_80] : memref<128x512xbf16, #tpu.memory_space<vmem>>, vector<128x128xbf16>
    %cst_81 = arith.constant dense<0.000000e+00> : vector<8x128xf32>
    %200 = tpu.matmul %180, %199, %cst_81 {dimension_numbers = #tpu.dot_dimension_numbers<[1], [0], [0], [1], [0, 0, 1, 1], [], []>} : vector<8x128xbf16>, vector<128x128xbf16>, vector<8x128xf32> -> vector<8x128xf32>
    %201 = vector.broadcast %9 : vector<1x128xf32> to vector<8x128xf32>
    %202 = arith.addf %198, %201 : vector<8x128xf32>
    %203 = arith.addf %202, %200 : vector<8x128xf32>
    %204 = math.tanh %203 : vector<8x128xf32>
    %205 = arith.mulf %195, %204 : vector<8x128xf32>
    %206 = arith.index_cast %182 : i32 to index
    %c128_82 = arith.constant 128 : index
    %207 = vector.load %arg8[%206, %c128_82] : memref<48x512xbf16, #tpu.memory_space<vmem>>, vector<8x128xbf16>
    %208 = arith.extf %207 : vector<8x128xbf16> to vector<8x128xf32>
    %c0_83 = arith.constant 0 : index
    %c128_84 = arith.constant 128 : index
    %209 = vector.load %arg3[%c0_83, %c128_84] : memref<128x512xbf16, #tpu.memory_space<vmem>>, vector<128x128xbf16>
    %cst_85 = arith.constant dense<0.000000e+00> : vector<8x128xf32>
    %210 = tpu.matmul %180, %209, %cst_85 {dimension_numbers = #tpu.dot_dimension_numbers<[1], [0], [0], [1], [0, 0, 1, 1], [], []>} : vector<8x128xbf16>, vector<128x128xbf16>, vector<8x128xf32> -> vector<8x128xf32>
    %211 = vector.broadcast %7 : vector<1x128xf32> to vector<8x128xf32>
    %212 = arith.addf %208, %211 : vector<8x128xf32>
    %213 = arith.addf %212, %210 : vector<8x128xf32>
    %214 = arith.negf %213 : vector<8x128xf32>
    %215 = math.exp %214 : vector<8x128xf32>
    %cst_86 = arith.constant 1.000000e+00 : f32
    %216 = vector.broadcast %cst_86 : f32 to vector<8x128xf32>
    %217 = arith.addf %216, %215 : vector<8x128xf32>
    %218 = arith.divf %216, %217 : vector<8x128xf32>
    %219 = arith.mulf %218, %164 : vector<8x128xf32>
    %220 = arith.addf %219, %205 : vector<8x128xf32>
    %221 = arith.index_cast %182 : i32 to index
    %c256_87 = arith.constant 256 : index
    %222 = vector.load %arg8[%221, %c256_87] : memref<48x512xbf16, #tpu.memory_space<vmem>>, vector<8x128xbf16>
    %223 = arith.extf %222 : vector<8x128xbf16> to vector<8x128xf32>
    %c0_88 = arith.constant 0 : index
    %c256_89 = arith.constant 256 : index
    %224 = vector.load %arg3[%c0_88, %c256_89] : memref<128x512xbf16, #tpu.memory_space<vmem>>, vector<128x128xbf16>
    %cst_90 = arith.constant dense<0.000000e+00> : vector<8x128xf32>
    %225 = tpu.matmul %180, %224, %cst_90 {dimension_numbers = #tpu.dot_dimension_numbers<[1], [0], [0], [1], [0, 0, 1, 1], [], []>} : vector<8x128xbf16>, vector<128x128xbf16>, vector<8x128xf32> -> vector<8x128xf32>
    %226 = vector.broadcast %8 : vector<1x128xf32> to vector<8x128xf32>
    %227 = arith.addf %223, %226 : vector<8x128xf32>
    %228 = arith.addf %227, %225 : vector<8x128xf32>
    %229 = arith.negf %228 : vector<8x128xf32>
    %230 = math.exp %229 : vector<8x128xf32>
    %cst_91 = arith.constant 1.000000e+00 : f32
    %231 = vector.broadcast %cst_91 : f32 to vector<8x128xf32>
    %232 = arith.addf %231, %230 : vector<8x128xf32>
    %233 = arith.divf %231, %232 : vector<8x128xf32>
    %234 = math.tanh %220 : vector<8x128xf32>
    %235 = arith.mulf %233, %234 : vector<8x128xf32>
    %c4_i32 = arith.constant 4 : i32
    %236 = arith.truncf %235 : vector<8x128xf32> to vector<8x128xbf16>
    %c8_i32_92 = arith.constant 8 : i32
    %237 = arith.muli %c4_i32, %c8_i32_92 : i32
    %238 = tpu.assume_multiple %237, 8 : i32
    %239 = arith.index_cast %238 : i32 to index
    %c0_93 = arith.constant 0 : index
    %240 = vector.load %arg8[%239, %c0_93] : memref<48x512xbf16, #tpu.memory_space<vmem>>, vector<8x128xbf16>
    %241 = arith.extf %240 : vector<8x128xbf16> to vector<8x128xf32>
    %c0_94 = arith.constant 0 : index
    %c0_95 = arith.constant 0 : index
    %242 = vector.load %arg3[%c0_94, %c0_95] : memref<128x512xbf16, #tpu.memory_space<vmem>>, vector<128x128xbf16>
    %cst_96 = arith.constant dense<0.000000e+00> : vector<8x128xf32>
    %243 = tpu.matmul %236, %242, %cst_96 {dimension_numbers = #tpu.dot_dimension_numbers<[1], [0], [0], [1], [0, 0, 1, 1], [], []>} : vector<8x128xbf16>, vector<128x128xbf16>, vector<8x128xf32> -> vector<8x128xf32>
    %244 = vector.broadcast %6 : vector<1x128xf32> to vector<8x128xf32>
    %245 = arith.addf %241, %244 : vector<8x128xf32>
    %246 = arith.addf %245, %243 : vector<8x128xf32>
    %247 = arith.negf %246 : vector<8x128xf32>
    %248 = math.exp %247 : vector<8x128xf32>
    %cst_97 = arith.constant 1.000000e+00 : f32
    %249 = vector.broadcast %cst_97 : f32 to vector<8x128xf32>
    %250 = arith.addf %249, %248 : vector<8x128xf32>
    %251 = arith.divf %249, %250 : vector<8x128xf32>
    %252 = arith.index_cast %238 : i32 to index
    %c384_98 = arith.constant 384 : index
    %253 = vector.load %arg8[%252, %c384_98] : memref<48x512xbf16, #tpu.memory_space<vmem>>, vector<8x128xbf16>
    %254 = arith.extf %253 : vector<8x128xbf16> to vector<8x128xf32>
    %c0_99 = arith.constant 0 : index
    %c384_100 = arith.constant 384 : index
    %255 = vector.load %arg3[%c0_99, %c384_100] : memref<128x512xbf16, #tpu.memory_space<vmem>>, vector<128x128xbf16>
    %cst_101 = arith.constant dense<0.000000e+00> : vector<8x128xf32>
    %256 = tpu.matmul %236, %255, %cst_101 {dimension_numbers = #tpu.dot_dimension_numbers<[1], [0], [0], [1], [0, 0, 1, 1], [], []>} : vector<8x128xbf16>, vector<128x128xbf16>, vector<8x128xf32> -> vector<8x128xf32>
    %257 = vector.broadcast %9 : vector<1x128xf32> to vector<8x128xf32>
    %258 = arith.addf %254, %257 : vector<8x128xf32>
    %259 = arith.addf %258, %256 : vector<8x128xf32>
    %260 = math.tanh %259 : vector<8x128xf32>
    %261 = arith.mulf %251, %260 : vector<8x128xf32>
    %262 = arith.index_cast %238 : i32 to index
    %c128_102 = arith.constant 128 : index
    %263 = vector.load %arg8[%262, %c128_102] : memref<48x512xbf16, #tpu.memory_space<vmem>>, vector<8x128xbf16>
    %264 = arith.extf %263 : vector<8x128xbf16> to vector<8x128xf32>
    %c0_103 = arith.constant 0 : index
    %c128_104 = arith.constant 128 : index
    %265 = vector.load %arg3[%c0_103, %c128_104] : memref<128x512xbf16, #tpu.memory_space<vmem>>, vector<128x128xbf16>
    %cst_105 = arith.constant dense<0.000000e+00> : vector<8x128xf32>
    %266 = tpu.matmul %236, %265, %cst_105 {dimension_numbers = #tpu.dot_dimension_numbers<[1], [0], [0], [1], [0, 0, 1, 1], [], []>} : vector<8x128xbf16>, vector<128x128xbf16>, vector<8x128xf32> -> vector<8x128xf32>
    %267 = vector.broadcast %7 : vector<1x128xf32> to vector<8x128xf32>
    %268 = arith.addf %264, %267 : vector<8x128xf32>
    %269 = arith.addf %268, %266 : vector<8x128xf32>
    %270 = arith.negf %269 : vector<8x128xf32>
    %271 = math.exp %270 : vector<8x128xf32>
    %cst_106 = arith.constant 1.000000e+00 : f32
    %272 = vector.broadcast %cst_106 : f32 to vector<8x128xf32>
    %273 = arith.addf %272, %271 : vector<8x128xf32>
    %274 = arith.divf %272, %273 : vector<8x128xf32>
    %275 = arith.mulf %274, %220 : vector<8x128xf32>
    %276 = arith.addf %275, %261 : vector<8x128xf32>
    %277 = arith.index_cast %238 : i32 to index
    %c256_107 = arith.constant 256 : index
    %278 = vector.load %arg8[%277, %c256_107] : memref<48x512xbf16, #tpu.memory_space<vmem>>, vector<8x128xbf16>
    %279 = arith.extf %278 : vector<8x128xbf16> to vector<8x128xf32>
    %c0_108 = arith.constant 0 : index
    %c256_109 = arith.constant 256 : index
    %280 = vector.load %arg3[%c0_108, %c256_109] : memref<128x512xbf16, #tpu.memory_space<vmem>>, vector<128x128xbf16>
    %cst_110 = arith.constant dense<0.000000e+00> : vector<8x128xf32>
    %281 = tpu.matmul %236, %280, %cst_110 {dimension_numbers = #tpu.dot_dimension_numbers<[1], [0], [0], [1], [0, 0, 1, 1], [], []>} : vector<8x128xbf16>, vector<128x128xbf16>, vector<8x128xf32> -> vector<8x128xf32>
    %282 = vector.broadcast %8 : vector<1x128xf32> to vector<8x128xf32>
    %283 = arith.addf %279, %282 : vector<8x128xf32>
    %284 = arith.addf %283, %281 : vector<8x128xf32>
    %285 = arith.negf %284 : vector<8x128xf32>
    %286 = math.exp %285 : vector<8x128xf32>
    %cst_111 = arith.constant 1.000000e+00 : f32
    %287 = vector.broadcast %cst_111 : f32 to vector<8x128xf32>
    %288 = arith.addf %287, %286 : vector<8x128xf32>
    %289 = arith.divf %287, %288 : vector<8x128xf32>
    %290 = math.tanh %276 : vector<8x128xf32>
    %291 = arith.mulf %289, %290 : vector<8x128xf32>
    %c5_i32 = arith.constant 5 : i32
    %292 = arith.truncf %291 : vector<8x128xf32> to vector<8x128xbf16>
    %c8_i32_112 = arith.constant 8 : i32
    %293 = arith.muli %c5_i32, %c8_i32_112 : i32
    %294 = tpu.assume_multiple %293, 8 : i32
    %295 = arith.index_cast %294 : i32 to index
    %c0_113 = arith.constant 0 : index
    %296 = vector.load %arg8[%295, %c0_113] : memref<48x512xbf16, #tpu.memory_space<vmem>>, vector<8x128xbf16>
    %297 = arith.extf %296 : vector<8x128xbf16> to vector<8x128xf32>
    %c0_114 = arith.constant 0 : index
    %c0_115 = arith.constant 0 : index
    %298 = vector.load %arg3[%c0_114, %c0_115] : memref<128x512xbf16, #tpu.memory_space<vmem>>, vector<128x128xbf16>
    %cst_116 = arith.constant dense<0.000000e+00> : vector<8x128xf32>
    %299 = tpu.matmul %292, %298, %cst_116 {dimension_numbers = #tpu.dot_dimension_numbers<[1], [0], [0], [1], [0, 0, 1, 1], [], []>} : vector<8x128xbf16>, vector<128x128xbf16>, vector<8x128xf32> -> vector<8x128xf32>
    %300 = vector.broadcast %6 : vector<1x128xf32> to vector<8x128xf32>
    %301 = arith.addf %297, %300 : vector<8x128xf32>
    %302 = arith.addf %301, %299 : vector<8x128xf32>
    %303 = arith.negf %302 : vector<8x128xf32>
    %304 = math.exp %303 : vector<8x128xf32>
    %cst_117 = arith.constant 1.000000e+00 : f32
    %305 = vector.broadcast %cst_117 : f32 to vector<8x128xf32>
    %306 = arith.addf %305, %304 : vector<8x128xf32>
    %307 = arith.divf %305, %306 : vector<8x128xf32>
    %308 = arith.index_cast %294 : i32 to index
    %c384_118 = arith.constant 384 : index
    %309 = vector.load %arg8[%308, %c384_118] : memref<48x512xbf16, #tpu.memory_space<vmem>>, vector<8x128xbf16>
    %310 = arith.extf %309 : vector<8x128xbf16> to vector<8x128xf32>
    %c0_119 = arith.constant 0 : index
    %c384_120 = arith.constant 384 : index
    %311 = vector.load %arg3[%c0_119, %c384_120] : memref<128x512xbf16, #tpu.memory_space<vmem>>, vector<128x128xbf16>
    %cst_121 = arith.constant dense<0.000000e+00> : vector<8x128xf32>
    %312 = tpu.matmul %292, %311, %cst_121 {dimension_numbers = #tpu.dot_dimension_numbers<[1], [0], [0], [1], [0, 0, 1, 1], [], []>} : vector<8x128xbf16>, vector<128x128xbf16>, vector<8x128xf32> -> vector<8x128xf32>
    %313 = vector.broadcast %9 : vector<1x128xf32> to vector<8x128xf32>
    %314 = arith.addf %310, %313 : vector<8x128xf32>
    %315 = arith.addf %314, %312 : vector<8x128xf32>
    %316 = math.tanh %315 : vector<8x128xf32>
    %317 = arith.mulf %307, %316 : vector<8x128xf32>
    %318 = arith.index_cast %294 : i32 to index
    %c128_122 = arith.constant 128 : index
    %319 = vector.load %arg8[%318, %c128_122] : memref<48x512xbf16, #tpu.memory_space<vmem>>, vector<8x128xbf16>
    %320 = arith.extf %319 : vector<8x128xbf16> to vector<8x128xf32>
    %c0_123 = arith.constant 0 : index
    %c128_124 = arith.constant 128 : index
    %321 = vector.load %arg3[%c0_123, %c128_124] : memref<128x512xbf16, #tpu.memory_space<vmem>>, vector<128x128xbf16>
    %cst_125 = arith.constant dense<0.000000e+00> : vector<8x128xf32>
    %322 = tpu.matmul %292, %321, %cst_125 {dimension_numbers = #tpu.dot_dimension_numbers<[1], [0], [0], [1], [0, 0, 1, 1], [], []>} : vector<8x128xbf16>, vector<128x128xbf16>, vector<8x128xf32> -> vector<8x128xf32>
    %323 = vector.broadcast %7 : vector<1x128xf32> to vector<8x128xf32>
    %324 = arith.addf %320, %323 : vector<8x128xf32>
    %325 = arith.addf %324, %322 : vector<8x128xf32>
    %326 = arith.negf %325 : vector<8x128xf32>
    %327 = math.exp %326 : vector<8x128xf32>
    %cst_126 = arith.constant 1.000000e+00 : f32
    %328 = vector.broadcast %cst_126 : f32 to vector<8x128xf32>
    %329 = arith.addf %328, %327 : vector<8x128xf32>
    %330 = arith.divf %328, %329 : vector<8x128xf32>
    %331 = arith.mulf %330, %276 : vector<8x128xf32>
    %332 = arith.addf %331, %317 : vector<8x128xf32>
    %333 = arith.index_cast %294 : i32 to index
    %c256_127 = arith.constant 256 : index
    %334 = vector.load %arg8[%333, %c256_127] : memref<48x512xbf16, #tpu.memory_space<vmem>>, vector<8x128xbf16>
    %335 = arith.extf %334 : vector<8x128xbf16> to vector<8x128xf32>
    %c0_128 = arith.constant 0 : index
    %c256_129 = arith.constant 256 : index
    %336 = vector.load %arg3[%c0_128, %c256_129] : memref<128x512xbf16, #tpu.memory_space<vmem>>, vector<128x128xbf16>
    %cst_130 = arith.constant dense<0.000000e+00> : vector<8x128xf32>
    %337 = tpu.matmul %292, %336, %cst_130 {dimension_numbers = #tpu.dot_dimension_numbers<[1], [0], [0], [1], [0, 0, 1, 1], [], []>} : vector<8x128xbf16>, vector<128x128xbf16>, vector<8x128xf32> -> vector<8x128xf32>
    %338 = vector.broadcast %8 : vector<1x128xf32> to vector<8x128xf32>
    %339 = arith.addf %335, %338 : vector<8x128xf32>
    %340 = arith.addf %339, %337 : vector<8x128xf32>
    %341 = arith.negf %340 : vector<8x128xf32>
    %342 = math.exp %341 : vector<8x128xf32>
    %cst_131 = arith.constant 1.000000e+00 : f32
    %343 = vector.broadcast %cst_131 : f32 to vector<8x128xf32>
    %344 = arith.addf %343, %342 : vector<8x128xf32>
    %345 = arith.divf %343, %344 : vector<8x128xf32>
    %346 = math.tanh %332 : vector<8x128xf32>
    %347 = arith.mulf %345, %346 : vector<8x128xf32>
    %c6_i32 = arith.constant 6 : i32
    %c0_132 = arith.constant 0 : index
    %c0_133 = arith.constant 0 : index
    %348 = vector.load %arg5[%c0_132, %c0_133] : memref<1x128xf32, #tpu.memory_space<vmem>>, vector<1x128xf32>
    %349 = vector.broadcast %348 : vector<1x128xf32> to vector<8x128xf32>
    %350 = arith.mulf %347, %349 : vector<8x128xf32>
    %cst_134 = arith.constant dense<0.000000e+00> : vector<8xf32>
    %351 = vector.multi_reduction <add>, %350, %cst_134 [1] : vector<8x128xf32> to vector<8xf32>
    %352 = vector.shape_cast %351 : vector<8xf32> to vector<8x1xf32>
    %c0_135 = arith.constant 0 : index
    %c0_136 = arith.constant 0 : index
    %353 = vector.load %arg6[%c0_135, %c0_136] : memref<1x1xf32, #tpu.memory_space<vmem>>, vector<1x1xf32>
    %354 = vector.broadcast %353 : vector<1x1xf32> to vector<8x1xf32>
    %355 = arith.addf %352, %354 : vector<8x1xf32>
    %c0_137 = arith.constant 0 : index
    %c0_138 = arith.constant 0 : index
    %356 = vector.load %arg7[%c0_137, %c0_138] : memref<8x1xf32, #tpu.memory_space<vmem>>, vector<8x1xf32>
    tpu.vector_store %arg7[%c0_137, %c0_138], %355 {strides = array<i32>} : memref<8x1xf32, #tpu.memory_space<vmem>>, vector<8x1xf32>,
    return
  }
  func.func @transform_0(%arg0: i32) -> (i32, i32, i32) {
    %c0_i32 = arith.constant 0 : i32
    %c0_i32_0 = arith.constant 0 : i32
    %c0_i32_1 = arith.constant 0 : i32
    return %arg0, %c0_i32, %c0_i32_0 : i32, i32, i32
  }
  func.func @transform_1(%arg0: i32) -> (i32, i32) {
    %c0_i32 = arith.constant 0 : i32
    %c0_i32_0 = arith.constant 0 : i32
    %c0_i32_1 = arith.constant 0 : i32
    return %c0_i32, %c0_i32_0 : i32, i32
  }
  func.func @transform_2(%arg0: i32) -> (i32, i32) {
    %c0_i32 = arith.constant 0 : i32
    %c0_i32_0 = arith.constant 0 : i32
    %c0_i32_1 = arith.constant 0 : i32
    return %c0_i32, %c0_i32_0 : i32, i32
  }
  func.func @transform_3(%arg0: i32) -> (i32, i32) {
    %c0_i32 = arith.constant 0 : i32
    %c0_i32_0 = arith.constant 0 : i32
    %c0_i32_1 = arith.constant 0 : i32
    return %c0_i32, %c0_i32_0 : i32, i32
  }
  func.func @transform_4(%arg0: i32) -> (i32, i32) {
    %c0_i32 = arith.constant 0 : i32
    %c0_i32_0 = arith.constant 0 : i32
    %c0_i32_1 = arith.constant 0 : i32
    return %c0_i32, %c0_i32_0 : i32, i32
  }
  func.func @transform_5(%arg0: i32) -> (i32, i32) {
    %c0_i32 = arith.constant 0 : i32
    %c0_i32_0 = arith.constant 0 : i32
    %c0_i32_1 = arith.constant 0 : i32
    return %c0_i32, %c0_i32_0 : i32, i32
  }
  func.func @transform_6(%arg0: i32) -> (i32, i32) {
    %c0_i32 = arith.constant 0 : i32
    %c0_i32_0 = arith.constant 0 : i32
    return %arg0, %c0_i32 : i32, i32
  }
}

</mosaic_0001>

<llo_original>
// kernel: tpu_custom_call.1
$region0: #{tpu_custom_call.1}
  #allocation0 [shape = 'u32[]', space=smem, size = 0x4, offset = 0x4, fixed_abs, tag = 'smem constant byte address 0x4 - core index']
  #allocation1 [shape = 'u32[144,128]{1,0:T(1,128)}', space=vmem, size = 0x12000, scoped, tag = 'internal scratch']
  #allocation2 [shape = 'bf16[48,512]{1,0:T(8,128)(2,1)}', space=vmem, size = 0xc000, scoped, tag = 'scratch operand']
  #allocation3 [shape = 'f32[1,1]{1,0:T(1,128)S(1)}', space=vmem, size = 0x200, scoped, tag = 'scoped memory for tpu_custom_call.1']
  %s0 = inlined_call_operand.vmem [shape: bf16[1,48,12], index: 0, kind: input, shape index: {}]
  %s1 = inlined_call_operand.vmem [shape: bf16[12,512], index: 1, kind: input, shape index: {}]
  %s2 = inlined_call_operand.hbm [shape: bf16[128,512], index: 2, kind: input, shape index: {}]
  %s3 = inlined_call_operand.vmem [shape: f32[1,512], index: 3, kind: input, shape index: {}]
  %s4 = inlined_call_operand.vmem [shape: f32[1,128], index: 4, kind: input, shape index: {}]
  %s5 = inlined_call_operand.<no memory space> [shape: f32[1,1], index: 5, kind: input, shape index: {}]
  %s6 = inlined_call_operand.vmem [shape: f32[8,1], index: 6, kind: output, shape index: {}]
  %s7 = sld [smem:[#allocation0]]
  $region38: #{tpu_custom_call.1} parent=0
    _
  %s9 = ssub.s32 1, %s7
  %s10 = scalar_select 0, %s9, %s7
  %v11 = vstv %s5
  %12 = vst [vmem:[#allocation3] sm:$0x1] %v11
  $region1: #{tpu_custom_call.1} parent=0
    #allocation4 [shape = 'u8[131072]{0}', space=vmem, size = 0x20000, scoped, tag = 'input window, operand 2, single buffered']
    #allocation5 [shape = 's32[1]{0}', space=sflag, size = 0x4, scoped, tag = 'scoped memory for tpu_custom_call.1']
    %13 = vsyncpa [#allocation5], 0
    // Predicated region
    $region2: #{tpu_custom_call.1} parent=1 // pred_check
      _
    $region3: #{tpu_custom_call.1} parent=1 // pred_check_branch
      %15 = sbr.rel (0) target = $region5
    $region4: #{tpu_custom_call.1} parent=1 // pred_region
      _
    $region5: #{tpu_custom_call.1} parent=1 // pred_fallthru
      _
    // Predicated region
    $region6: #{tpu_custom_call.1} parent=1 // pred_check
      _
    $region7: #{tpu_custom_call.1} parent=1 // pred_check_branch
      %17 = sbr.rel (0) target = $region9
    $region8: #{tpu_custom_call.1} parent=1 // pred_region
      _
    $region9: #{tpu_custom_call.1} parent=1 // pred_fallthru
      _
    // Predicated region
    $region10: #{tpu_custom_call.1} parent=1 // pred_check
      _
    $region11: #{tpu_custom_call.1} parent=1 // pred_check_branch
      %19 = sbr.rel (0) target = $region13
    $region12: #{tpu_custom_call.1} parent=1 // pred_region
      %s21 = ssub.s32 4096, 4096
      %22 = vsyncadd [#allocation5], %s21
      %s23 = sshll.u32 [#allocation4], 4
      %s24 = int_to_ptr.vmem [resolvable:$true] %s23
      %29 = dma.hbm_to_vmem [thread:$0]  %s2, 4096, %s24, [#allocation5], 256, 256, 16
    $region13: #{tpu_custom_call.1} parent=1 // pred_fallthru
      _
    // Predicated region
    $region14: #{tpu_custom_call.1} parent=1 // pred_check
      _
    $region15: #{tpu_custom_call.1} parent=1 // pred_check_branch
      %31 = sbr.rel (0) target = $region17
    $region16: #{tpu_custom_call.1} parent=1 // pred_region
      _
    $region17: #{tpu_custom_call.1} parent=1 // pred_fallthru
      _
    // Predicated region
    $region18: #{tpu_custom_call.1} parent=1 // pred_check
      _
    $region19: #{tpu_custom_call.1} parent=1 // pred_check_branch
      %33 = sbr.rel (0) target = $region21
    $region20: #{tpu_custom_call.1} parent=1 // pred_region
      _
    $region21: #{tpu_custom_call.1} parent=1 // pred_fallthru
      _
    // Predicated region
    $region22: #{tpu_custom_call.1} parent=1 // pred_check
      _
    $region23: #{tpu_custom_call.1} parent=1 // pred_check_branch
      %35 = sbr.rel (0) target = $region25
    $region24: #{tpu_custom_call.1} parent=1 // pred_region
      _
    $region25: #{tpu_custom_call.1} parent=1 // pred_fallthru
      _
    // Predicated region
    $region26: #{tpu_custom_call.1} parent=1 // pred_check
      _
    $region27: #{tpu_custom_call.1} parent=1 // pred_check_branch
      %37 = sbr.rel (0) target = $region29
    $region28: #{tpu_custom_call.1} parent=1 // pred_region
      %38 = dma.done [#allocation5], 4096
    $region29: #{tpu_custom_call.1} parent=1 // pred_fallthru
      _
    %v40 = vld [vmem:[%s0] sm:$0xf]
    %v41 = vld [vmem:[%s0 + $0x4] sm:$0xf]
    %v42 = vld [vmem:[%s0 + $0x8] sm:$0xf]
    %v43 = vld [vmem:[%s0 + $0xc] sm:$0xf]
    %v44 = vld [vmem:[%s0 + $0x10] sm:$0xf]
    %v45 = vld [vmem:[%s0 + $0x14] sm:$0xf]
    %v46 = vld [vmem:[%s1] sm:$0xff]
    %v47 = vld [vmem:[%s1 + $0x8] sm:$0xff]
    %v48 = vld [vmem:[%s1 + $0x10] sm:$0x33]
    %v49 = vld [vmem:[%s1 + $0x18] sm:$0x33]
    %v56 = vunpack.c.l.b16 %v40
    %v57 = vunpack.c.l.b16 %v41
    %v58 = vunpack.c.l.b16 %v42
    %v59 = vunpack.c.l.b16 %v43
    %v60 = vunpack.c.l.b16 %v44
    %v61 = vunpack.c.l.b16 %v45
    %v62 = vpack.c.b16 %v57, %v56
    %v63 = vpack.c.b16 %v59, %v58
    %v64 = vpack.c.b16 %v61, %v60
    %v69 = vunpack.c.l.b16 %v46
    %v70 = vunpack.c.h.b16 %v46
    %v71 = vunpack.c.l.b16 %v47
    %v72 = vunpack.c.h.b16 %v47
    %v73 = vunpack.c.l.b16 %v48
    %v74 = vunpack.c.h.b16 %v48
    %v75 = vunpack.c.l.b16 %v49
    %v76 = vunpack.c.h.b16 %v49
    %v77 = vpack.c.b16 %v73, %v69
    %v78 = vpack.c.b16 %v74, %v70
    %v79 = vpack.c.b16 %v75, %v71
    %v80 = vpack.c.b16 %v76, %v72
    %vm81 = vcmask 97280
    %v83 = vsel %vm81, %v62, 0
    %v86 = vsel %vm81, %v63, 0
    %v89 = vsel %vm81, %v64, 0
    %vm91 = vcmask 1045504
    %v93 = vsel %vm91, %v77, 0
    %v96 = vsel %vm91, %v78, 0
    %v99 = vsel %vm91, %v79, 0
    %v102 = vsel %vm91, %v80, 0
    %104 = vmatprep.subr.bf16.mxu0 0
    %105 = vmatpush1.bf16.msra.mxu0 0
    %106 = vmatprep.subr.bf16.mxu0 0
    %107 = vmatpush1.bf16.msra.mxu0 0
    %108 = vmatprep.subr.bf16.mxu0 0
    %109 = vmatpush1.bf16.msra.mxu0 0
    %110 = vmatprep.subr.bf16.mxu0 0
    %111 = vmatpush1.bf16.msra.mxu0 0
    %112 = vmatprep.subr.bf16.mxu0 0
    %113 = vmatpush1.bf16.msra.mxu0 0
    %114 = vmatprep.subr.bf16.mxu0 0
    %115 = vmatpush1.bf16.msra.mxu0 0
    %116 = vmatprep.subr.bf16.mxu0 0
    %117 = vmatpush1.bf16.msra.mxu0 0
    %118 = vmatprep.subr.bf16.mxu0 %v96
    %119 = vmatpush1.bf16.msra.mxu0 %v93
    %120 = vmatprep.subr.bf16.mxu0 0
    %121 = vmatpush2.bf16.msra.mxu0 0
    %122 = vmatprep.subr.bf16.mxu0 0
    %123 = vmatpush2.bf16.msra.mxu0 0
    %124 = vmatprep.subr.bf16.mxu0 0
    %125 = vmatpush2.bf16.msra.mxu0 0
    %126 = vmatprep.subr.bf16.mxu0 0
    %127 = vmatpush2.bf16.msra.mxu0 0
    %128 = vmatprep.subr.bf16.mxu0 0
    %129 = vmatpush2.bf16.msra.mxu0 0
    %130 = vmatprep.subr.bf16.mxu0 0
    %131 = vmatpush2.bf16.msra.mxu0 0
    %132 = vmatprep.subr.bf16.mxu0 0
    %133 = vmatpush2.bf16.msra.mxu0 0
    %134 = vmatprep.subr.bf16.mxu0 0
    %135 = vmatpush2.bf16.msra.mxu0 0
    %136 = vmatprep.mubr.bf16.mxu0 0
    %137 = vmatmul.mubr.bf16.gmra.mxu0 %v83
    %v138 = vpop.f32.mrf.mxu0
    %v139 = vadd.f32 0.0, %v138
    %v140 = vpop.f32.mrf.mxu0
    %v141 = vadd.f32 0.0, %v140
    %v142 = vpop.f32.mrf.mxu0
    %v143 = vadd.f32 0.0, %v142
    %v144 = vpop.f32.mrf.mxu0
    %v145 = vadd.f32 0.0, %v144
    %146 = vmatprep.mubr.bf16.mxu0 0
    %147 = vmatmul.mubr.bf16.gmra.mxu0 %v86
    %v148 = vpop.f32.mrf.mxu0
    %v149 = vadd.f32 0.0, %v148
    %v150 = vpop.f32.mrf.mxu0
    %v151 = vadd.f32 0.0, %v150
    %v152 = vpop.f32.mrf.mxu0
    %v153 = vadd.f32 0.0, %v152
    %v154 = vpop.f32.mrf.mxu0
    %v155 = vadd.f32 0.0, %v154
    %156 = vmatprep.mubr.bf16.mxu0 0
    %157 = vmatmul.mubr.bf16.gmra.mxu0 %v89
    %v158 = vpop.f32.mrf.mxu0
    %v159 = vadd.f32 0.0, %v158
    %v160 = vpop.f32.mrf.mxu0
    %v161 = vadd.f32 0.0, %v160
    %v162 = vpop.f32.mrf.mxu0
    %v163 = vadd.f32 0.0, %v162
    %v164 = vpop.f32.mrf.mxu0
    %v165 = vadd.f32 0.0, %v164
    %166 = vdwg.mxu0
    %167 = vmatprep.subr.bf16.mxu0 0
    %168 = vmatpush1.bf16.msra.mxu0 0
    %169 = vmatprep.subr.bf16.mxu0 0
    %170 = vmatpush1.bf16.msra.mxu0 0
    %171 = vmatprep.subr.bf16.mxu0 0
    %172 = vmatpush1.bf16.msra.mxu0 0
    %173 = vmatprep.subr.bf16.mxu0 0
    %174 = vmatpush1.bf16.msra.mxu0 0
    %175 = vmatprep.subr.bf16.mxu0 0
    %176 = vmatpush1.bf16.msra.mxu0 0
    %177 = vmatprep.subr.bf16.mxu0 0
    %178 = vmatpush1.bf16.msra.mxu0 0
    %179 = vmatprep.subr.bf16.mxu0 0
    %180 = vmatpush1.bf16.msra.mxu0 0
    %181 = vmatprep.subr.bf16.mxu0 %v102
    %182 = vmatpush1.bf16.msra.mxu0 %v99
    %183 = vmatprep.subr.bf16.mxu0 0
    %184 = vmatpush2.bf16.msra.mxu0 0
    %185 = vmatprep.subr.bf16.mxu0 0
    %186 = vmatpush2.bf16.msra.mxu0 0
    %187 = vmatprep.subr.bf16.mxu0 0
    %188 = vmatpush2.bf16.msra.mxu0 0
    %189 = vmatprep.subr.bf16.mxu0 0
    %190 = vmatpush2.bf16.msra.mxu0 0
    %191 = vmatprep.subr.bf16.mxu0 0
    %192 = vmatpush2.bf16.msra.mxu0 0
    %193 = vmatprep.subr.bf16.mxu0 0
    %194 = vmatpush2.bf16.msra.mxu0 0
    %195 = vmatprep.subr.bf16.mxu0 0
    %196 = vmatpush2.bf16.msra.mxu0 0
    %197 = vmatprep.subr.bf16.mxu0 0
    %198 = vmatpush2.bf16.msra.mxu0 0
    %199 = vmatprep.mubr.bf16.mxu0 0
    %200 = vmatmul.mubr.bf16.gmra.mxu0 %v83
    %v201 = vpop.f32.mrf.mxu0
    %v202 = vadd.f32 0.0, %v201
    %v203 = vpop.f32.mrf.mxu0
    %v204 = vadd.f32 0.0, %v203
    %v205 = vpop.f32.mrf.mxu0
    %v206 = vadd.f32 0.0, %v205
    %v207 = vpop.f32.mrf.mxu0
    %v208 = vadd.f32 0.0, %v207
    %209 = vmatprep.mubr.bf16.mxu0 0
    %210 = vmatmul.mubr.bf16.gmra.mxu0 %v86
    %v211 = vpop.f32.mrf.mxu0
    %v212 = vadd.f32 0.0, %v211
    %v213 = vpop.f32.mrf.mxu0
    %v214 = vadd.f32 0.0, %v213
    %v215 = vpop.f32.mrf.mxu0
    %v216 = vadd.f32 0.0, %v215
    %v217 = vpop.f32.mrf.mxu0
    %v218 = vadd.f32 0.0, %v217
    %219 = vmatprep.mubr.bf16.mxu0 0
    %220 = vmatmul.mubr.bf16.gmra.mxu0 %v89
    %v221 = vpop.f32.mrf.mxu0
    %v222 = vadd.f32 0.0, %v221
    %v223 = vpop.f32.mrf.mxu0
    %v224 = vadd.f32 0.0, %v223
    %v225 = vpop.f32.mrf.mxu0
    %v226 = vadd.f32 0.0, %v225
    %v227 = vpop.f32.mrf.mxu0
    %v228 = vadd.f32 0.0, %v227
    %229 = vdwg.mxu0
    %v230 = vpack.c.bf16 %v143, %v139
    %v231 = vpack.c.bf16 %v145, %v141
    %v232 = vpack.c.bf16 %v206, %v202
    %v233 = vpack.c.bf16 %v208, %v204
    %v234 = vpack.c.bf16 %v153, %v149
    %v235 = vpack.c.bf16 %v155, %v151
    %v236 = vpack.c.bf16 %v216, %v212
    %v237 = vpack.c.bf16 %v218, %v214
    %v238 = vpack.c.bf16 %v163, %v159
    %v239 = vpack.c.bf16 %v165, %v161
    %v240 = vpack.c.bf16 %v226, %v222
    %v241 = vpack.c.bf16 %v228, %v224
    %v254 = vunpack.c.l.b16 %v230
    %v255 = vunpack.c.l.b16 %v231
    %v256 = vunpack.c.l.b16 %v232
    %v257 = vunpack.c.l.b16 %v233
    %v258 = vunpack.c.h.b16 %v230
    %v259 = vunpack.c.h.b16 %v231
    %v260 = vunpack.c.h.b16 %v232
    %v261 = vunpack.c.h.b16 %v233
    %v262 = vunpack.c.l.b16 %v234
    %v263 = vunpack.c.l.b16 %v235
    %v264 = vunpack.c.l.b16 %v236
    %v265 = vunpack.c.l.b16 %v237
    %v266 = vunpack.c.h.b16 %v234
    %v267 = vunpack.c.h.b16 %v235
    %v268 = vunpack.c.h.b16 %v236
    %v269 = vunpack.c.h.b16 %v237
    %v270 = vunpack.c.l.b16 %v238
    %v271 = vunpack.c.l.b16 %v239
    %v272 = vunpack.c.l.b16 %v240
    %v273 = vunpack.c.l.b16 %v241
    %v274 = vunpack.c.h.b16 %v238
    %v275 = vunpack.c.h.b16 %v239
    %v276 = vunpack.c.h.b16 %v240
    %v277 = vunpack.c.h.b16 %v241
    %v278 = vpack.c.b16 %v255, %v254
    %v279 = vpack.c.b16 %v257, %v256
    %v280 = vpack.c.b16 %v259, %v258
    %v281 = vpack.c.b16 %v261, %v260
    %v282 = vpack.c.b16 %v263, %v262
    %v283 = vpack.c.b16 %v265, %v264
    %v284 = vpack.c.b16 %v267, %v266
    %v285 = vpack.c.b16 %v269, %v268
    %v286 = vpack.c.b16 %v271, %v270
    %v287 = vpack.c.b16 %v273, %v272
    %v288 = vpack.c.b16 %v275, %v274
    %v289 = vpack.c.b16 %v277, %v276
    %302 = vst [vmem:[#allocation2] sm:$0xff] %v278
    %303 = vst [vmem:[#allocation2 + $0x8] sm:$0xff] %v279
    %304 = vst [vmem:[#allocation2 + $0x10] sm:$0xff] %v280
    %305 = vst [vmem:[#allocation2 + $0x18] sm:$0xff] %v281
    %306 = vst [vmem:[#allocation2 + $0x20] sm:$0xff] %v282
    %307 = vst [vmem:[#allocation2 + $0x28] sm:$0xff] %v283
    %308 = vst [vmem:[#allocation2 + $0x30] sm:$0xff] %v284
    %309 = vst [vmem:[#allocation2 + $0x38] sm:$0xff] %v285
    %310 = vst [vmem:[#allocation2 + $0x40] sm:$0xff] %v286
    %311 = vst [vmem:[#allocation2 + $0x48] sm:$0xff] %v287
    %312 = vst [vmem:[#allocation2 + $0x50] sm:$0xff] %v288
    %313 = vst [vmem:[#allocation2 + $0x58] sm:$0xff] %v289
    %v314 = vld [vmem:[%s3] sm:$0x1]
    %v315 = vld [vmem:[%s3 + $0x1] sm:$0x1]
    %v316 = vld [vmem:[%s3 + $0x2] sm:$0x1]
    %v317 = vld [vmem:[%s3 + $0x3] sm:$0x1]
    %s318 = smul.u32 0, 4
    %s319 = smul.addr %s318, 4
    %s320 = scalar_lea.vmem [#allocation2], %s319
    %v321 = vld [vmem:[%s320] sm:$0xf]
    %v322 = vunpack.c.l.bf16 %v321
    %v323 = vld [vmem:[#allocation4] sm:$0xf]
    %v324 = vld [vmem:[#allocation4 + $0x10] sm:$0xf]
    %v325 = vld [vmem:[#allocation4 + $0x20] sm:$0xf]
    %v326 = vld [vmem:[#allocation4 + $0x30] sm:$0xf]
    %v327 = vld [vmem:[#allocation4 + $0x40] sm:$0xf]
    %v328 = vld [vmem:[#allocation4 + $0x50] sm:$0xf]
    %v329 = vld [vmem:[#allocation4 + $0x60] sm:$0xf]
    %v330 = vld [vmem:[#allocation4 + $0x70] sm:$0xf]
    %v331 = vld [vmem:[#allocation4 + $0x80] sm:$0xf]
    %v332 = vld [vmem:[#allocation4 + $0x90] sm:$0xf]
    %v333 = vld [vmem:[#allocation4 + $0xa0] sm:$0xf]
    %v334 = vld [vmem:[#allocation4 + $0xb0] sm:$0xf]
    %v335 = vld [vmem:[#allocation4 + $0xc0] sm:$0xf]
    %v336 = vld [vmem:[#allocation4 + $0xd0] sm:$0xf]
    %v337 = vld [vmem:[#allocation4 + $0xe0] sm:$0xf]
    %v338 = vld [vmem:[#allocation4 + $0xf0] sm:$0xf]
    %v355 = vunpack.c.l.b16 %v323
    %v356 = vunpack.c.l.b16 %v324
    %v357 = vunpack.c.l.b16 %v325
    %v358 = vunpack.c.l.b16 %v326
    %v359 = vunpack.c.l.b16 %v327
    %v360 = vunpack.c.l.b16 %v328
    %v361 = vunpack.c.l.b16 %v329
    %v362 = vunpack.c.l.b16 %v330
    %v363 = vunpack.c.l.b16 %v331
    %v364 = vunpack.c.l.b16 %v332
    %v365 = vunpack.c.l.b16 %v333
    %v366 = vunpack.c.l.b16 %v334
    %v367 = vunpack.c.l.b16 %v335
    %v368 = vunpack.c.l.b16 %v336
    %v369 = vunpack.c.l.b16 %v337
    %v370 = vunpack.c.l.b16 %v338
    %v371 = vpack.c.b16 %v356, %v355
    %v372 = vpack.c.b16 %v358, %v357
    %v373 = vpack.c.b16 %v360, %v359
    %v374 = vpack.c.b16 %v362, %v361
    %v375 = vpack.c.b16 %v364, %v363
    %v376 = vpack.c.b16 %v366, %v365
    %v377 = vpack.c.b16 %v368, %v367
    %v378 = vpack.c.b16 %v370, %v369
    %387 = vmatprep.subr.bf16.mxu0 0
    %388 = vmatpush1.bf16.msra.mxu0 %v378
    %389 = vmatprep.subr.bf16.mxu0 0
    %390 = vmatpush1.bf16.msra.mxu0 %v377
    %391 = vmatprep.subr.bf16.mxu0 0
    %392 = vmatpush1.bf16.msra.mxu0 %v376
    %393 = vmatprep.subr.bf16.mxu0 0
    %394 = vmatpush1.bf16.msra.mxu0 %v375
    %395 = vmatprep.subr.bf16.mxu0 0
    %396 = vmatpush1.bf16.msra.mxu0 %v374
    %397 = vmatprep.subr.bf16.mxu0 0
    %398 = vmatpush1.bf16.msra.mxu0 %v373
    %399 = vmatprep.subr.bf16.mxu0 0
    %400 = vmatpush1.bf16.msra.mxu0 %v372
    %401 = vmatprep.subr.bf16.mxu0 0
    %402 = vmatpush1.bf16.msra.mxu0 %v371
    %403 = vmatprep.subr.bf16.mxu0 0
    %404 = vmatpush2.bf16.msra.mxu0 0
    %405 = vmatprep.subr.bf16.mxu0 0
    %406 = vmatpush2.bf16.msra.mxu0 0
    %407 = vmatprep.subr.bf16.mxu0 0
    %408 = vmatpush2.bf16.msra.mxu0 0
    %409 = vmatprep.subr.bf16.mxu0 0
    %410 = vmatpush2.bf16.msra.mxu0 0
    %411 = vmatprep.subr.bf16.mxu0 0
    %412 = vmatpush2.bf16.msra.mxu0 0
    %413 = vmatprep.subr.bf16.mxu0 0
    %414 = vmatpush2.bf16.msra.mxu0 0
    %415 = vmatprep.subr.bf16.mxu0 0
    %416 = vmatpush2.bf16.msra.mxu0 0
    %417 = vmatprep.subr.bf16.mxu0 0
    %418 = vmatpush2.bf16.msra.mxu0 0
    %419 = vmatprep.mubr.bf16.mxu0 0
    %420 = vmatmul.mubr.bf16.gmra.mxu0 0
    %v421 = vpop.f32.mrf.mxu0
    %v422 = vadd.f32 0.0, %v421
    %v423 = vpop.f32.mrf.mxu0
    %v424 = vpop.f32.mrf.mxu0
    %v425 = vpop.f32.mrf.mxu0
    %426 = vdwg.mxu0
    %v428 = vlaneseq
    %v429 = vshrl.u32 %v428, 7
    %v430 = vsub.s32 0, %v429
    %v431 = vrot.slane %v314, %v430
    %v433 = vadd.f32 %v322, %v431
    %v434 = vadd.f32 %v433, %v422
    %v435 = vxor.u32 %v434, 2147483648
    %v436 = vmul.f32 %v435, 1.442695
    %v437 = vpow.pop %v436
    %v438 = vadd.f32 %v437, 1.0
    %v439 = vrcp.pop %v438
    %v440 = vmul.f32 1.0, %v439
    %v441 = vld [vmem:[%s320 + $0xc] sm:$0xf]
    %v442 = vunpack.c.l.bf16 %v441
    %v443 = vld [vmem:[#allocation4 + $0xc] sm:$0xf]
    %v444 = vld [vmem:[#allocation4 + $0x1c] sm:$0xf]
    %v445 = vld [vmem:[#allocation4 + $0x2c] sm:$0xf]
    %v446 = vld [vmem:[#allocation4 + $0x3c] sm:$0xf]
    %v447 = vld [vmem:[#allocation4 + $0x4c] sm:$0xf]
    %v448 = vld [vmem:[#allocation4 + $0x5c] sm:$0xf]
    %v449 = vld [vmem:[#allocation4 + $0x6c] sm:$0xf]
    %v450 = vld [vmem:[#allocation4 + $0x7c] sm:$0xf]
    %v451 = vld [vmem:[#allocation4 + $0x8c] sm:$0xf]
    %v452 = vld [vmem:[#allocation4 + $0x9c] sm:$0xf]
    %v453 = vld [vmem:[#allocation4 + $0xac] sm:$0xf]
    %v454 = vld [vmem:[#allocation4 + $0xbc] sm:$0xf]
    %v455 = vld [vmem:[#allocation4 + $0xcc] sm:$0xf]
    %v456 = vld [vmem:[#allocation4 + $0xdc] sm:$0xf]
    %v457 = vld [vmem:[#allocation4 + $0xec] sm:$0xf]
    %v458 = vld [vmem:[#allocation4 + $0xfc] sm:$0xf]
    %v475 = vunpack.c.l.b16 %v443
    %v476 = vunpack.c.l.b16 %v444
    %v477 = vunpack.c.l.b16 %v445
    %v478 = vunpack.c.l.b16 %v446
    %v479 = vunpack.c.l.b16 %v447
    %v480 = vunpack.c.l.b16 %v448
    %v481 = vunpack.c.l.b16 %v449
    %v482 = vunpack.c.l.b16 %v450
    %v483 = vunpack.c.l.b16 %v451
    %v484 = vunpack.c.l.b16 %v452
    %v485 = vunpack.c.l.b16 %v453
    %v486 = vunpack.c.l.b16 %v454
    %v487 = vunpack.c.l.b16 %v455
    %v488 = vunpack.c.l.b16 %v456
    %v489 = vunpack.c.l.b16 %v457
    %v490 = vunpack.c.l.b16 %v458
    %v491 = vpack.c.b16 %v476, %v475
    %v492 = vpack.c.b16 %v478, %v477
    %v493 = vpack.c.b16 %v480, %v479
    %v494 = vpack.c.b16 %v482, %v481
    %v495 = vpack.c.b16 %v484, %v483
    %v496 = vpack.c.b16 %v486, %v485
    %v497 = vpack.c.b16 %v488, %v487
    %v498 = vpack.c.b16 %v490, %v489
    %507 = vmatprep.subr.bf16.mxu0 0
    %508 = vmatpush1.bf16.msra.mxu0 %v498
    %509 = vmatprep.subr.bf16.mxu0 0
    %510 = vmatpush1.bf16.msra.mxu0 %v497
    %511 = vmatprep.subr.bf16.mxu0 0
    %512 = vmatpush1.bf16.msra.mxu0 %v496
    %513 = vmatprep.subr.bf16.mxu0 0
    %514 = vmatpush1.bf16.msra.mxu0 %v495
    %515 = vmatprep.subr.bf16.mxu0 0
    %516 = vmatpush1.bf16.msra.mxu0 %v494
    %517 = vmatprep.subr.bf16.mxu0 0
    %518 = vmatpush1.bf16.msra.mxu0 %v493
    %519 = vmatprep.subr.bf16.mxu0 0
    %520 = vmatpush1.bf16.msra.mxu0 %v492
    %521 = vmatprep.subr.bf16.mxu0 0
    %522 = vmatpush1.bf16.msra.mxu0 %v491
    %523 = vmatprep.subr.bf16.mxu0 0
    %524 = vmatpush2.bf16.msra.mxu0 0
    %525 = vmatprep.subr.bf16.mxu0 0
    %526 = vmatpush2.bf16.msra.mxu0 0
    %527 = vmatprep.subr.bf16.mxu0 0
    %528 = vmatpush2.bf16.msra.mxu0 0
    %529 = vmatprep.subr.bf16.mxu0 0
    %530 = vmatpush2.bf16.msra.mxu0 0
    %531 = vmatprep.subr.bf16.mxu0 0
    %532 = vmatpush2.bf16.msra.mxu0 0
    %533 = vmatprep.subr.bf16.mxu0 0
    %534 = vmatpush2.bf16.msra.mxu0 0
    %535 = vmatprep.subr.bf16.mxu0 0
    %536 = vmatpush2.bf16.msra.mxu0 0
    %537 = vmatprep.subr.bf16.mxu0 0
    %538 = vmatpush2.bf16.msra.mxu0 0
    %539 = vmatprep.mubr.bf16.mxu0 0
    %540 = vmatmul.mubr.bf16.gmra.mxu0 0
    %v541 = vpop.f32.mrf.mxu0
    %v542 = vadd.f32 0.0, %v541
    %v543 = vpop.f32.mrf.mxu0
    %v544 = vpop.f32.mrf.mxu0
    %v545 = vpop.f32.mrf.mxu0
    %546 = vdwg.mxu0
    %v548 = vlaneseq
    %v549 = vshrl.u32 %v548, 7
    %v550 = vsub.s32 0, %v549
    %v551 = vrot.slane %v317, %v550
    %v553 = vadd.f32 %v442, %v551
    %v554 = vadd.f32 %v553, %v542
    %v555 = vtanh.pop %v554
    %v556 = vmul.f32 %v440, %v555
    %v557 = vld [vmem:[%s320 + $0x4] sm:$0xf]
    %v558 = vunpack.c.l.bf16 %v557
    %v559 = vld [vmem:[#allocation4 + $0x4] sm:$0xf]
    %v560 = vld [vmem:[#allocation4 + $0x14] sm:$0xf]
    %v561 = vld [vmem:[#allocation4 + $0x24] sm:$0xf]
    %v562 = vld [vmem:[#allocation4 + $0x34] sm:$0xf]
    %v563 = vld [vmem:[#allocation4 + $0x44] sm:$0xf]
    %v564 = vld [vmem:[#allocation4 + $0x54] sm:$0xf]
    %v565 = vld [vmem:[#allocation4 + $0x64] sm:$0xf]
    %v566 = vld [vmem:[#allocation4 + $0x74] sm:$0xf]
    %v567 = vld [vmem:[#allocation4 + $0x84] sm:$0xf]
    %v568 = vld [vmem:[#allocation4 + $0x94] sm:$0xf]
    %v569 = vld [vmem:[#allocation4 + $0xa4] sm:$0xf]
    %v570 = vld [vmem:[#allocation4 + $0xb4] sm:$0xf]
    %v571 = vld [vmem:[#allocation4 + $0xc4] sm:$0xf]
    %v572 = vld [vmem:[#allocation4 + $0xd4] sm:$0xf]
    %v573 = vld [vmem:[#allocation4 + $0xe4] sm:$0xf]
    %v574 = vld [vmem:[#allocation4 + $0xf4] sm:$0xf]
    %v591 = vunpack.c.l.b16 %v559
    %v592 = vunpack.c.l.b16 %v560
    %v593 = vunpack.c.l.b16 %v561
    %v594 = vunpack.c.l.b16 %v562
    %v595 = vunpack.c.l.b16 %v563
    %v596 = vunpack.c.l.b16 %v564
    %v597 = vunpack.c.l.b16 %v565
    %v598 = vunpack.c.l.b16 %v566
    %v599 = vunpack.c.l.b16 %v567
    %v600 = vunpack.c.l.b16 %v568
    %v601 = vunpack.c.l.b16 %v569
    %v602 = vunpack.c.l.b16 %v570
    %v603 = vunpack.c.l.b16 %v571
    %v604 = vunpack.c.l.b16 %v572
    %v605 = vunpack.c.l.b16 %v573
    %v606 = vunpack.c.l.b16 %v574
    %v607 = vpack.c.b16 %v592, %v591
    %v608 = vpack.c.b16 %v594, %v593
    %v609 = vpack.c.b16 %v596, %v595
    %v610 = vpack.c.b16 %v598, %v597
    %v611 = vpack.c.b16 %v600, %v599
    %v612 = vpack.c.b16 %v602, %v601
    %v613 = vpack.c.b16 %v604, %v603
    %v614 = vpack.c.b16 %v606, %v605
    %623 = vmatprep.subr.bf16.mxu0 0
    %624 = vmatpush1.bf16.msra.mxu0 %v614
    %625 = vmatprep.subr.bf16.mxu0 0
    %626 = vmatpush1.bf16.msra.mxu0 %v613
    %627 = vmatprep.subr.bf16.mxu0 0
    %628 = vmatpush1.bf16.msra.mxu0 %v612
    %629 = vmatprep.subr.bf16.mxu0 0
    %630 = vmatpush1.bf16.msra.mxu0 %v611
    %631 = vmatprep.subr.bf16.mxu0 0
    %632 = vmatpush1.bf16.msra.mxu0 %v610
    %633 = vmatprep.subr.bf16.mxu0 0
    %634 = vmatpush1.bf16.msra.mxu0 %v609
    %635 = vmatprep.subr.bf16.mxu0 0
    %636 = vmatpush1.bf16.msra.mxu0 %v608
    %637 = vmatprep.subr.bf16.mxu0 0
    %638 = vmatpush1.bf16.msra.mxu0 %v607
    %639 = vmatprep.subr.bf16.mxu0 0
    %640 = vmatpush2.bf16.msra.mxu0 0
    %641 = vmatprep.subr.bf16.mxu0 0
    %642 = vmatpush2.bf16.msra.mxu0 0
    %643 = vmatprep.subr.bf16.mxu0 0
    %644 = vmatpush2.bf16.msra.mxu0 0
    %645 = vmatprep.subr.bf16.mxu0 0
    %646 = vmatpush2.bf16.msra.mxu0 0
    %647 = vmatprep.subr.bf16.mxu0 0
    %648 = vmatpush2.bf16.msra.mxu0 0
    %649 = vmatprep.subr.bf16.mxu0 0
    %650 = vmatpush2.bf16.msra.mxu0 0
    %651 = vmatprep.subr.bf16.mxu0 0
    %652 = vmatpush2.bf16.msra.mxu0 0
    %653 = vmatprep.subr.bf16.mxu0 0
    %654 = vmatpush2.bf16.msra.mxu0 0
    %655 = vmatprep.mubr.bf16.mxu0 0
    %656 = vmatmul.mubr.bf16.gmra.mxu0 0
    %v657 = vpop.f32.mrf.mxu0
    %v658 = vadd.f32 0.0, %v657
    %v659 = vpop.f32.mrf.mxu0
    %v660 = vpop.f32.mrf.mxu0
    %v661 = vpop.f32.mrf.mxu0
    %662 = vdwg.mxu0
    %v664 = vlaneseq
    %v665 = vshrl.u32 %v664, 7
    %v666 = vsub.s32 0, %v665
    %v667 = vrot.slane %v315, %v666
    %v669 = vadd.f32 %v558, %v667
    %v670 = vadd.f32 %v669, %v658
    %v671 = vxor.u32 %v670, 2147483648
    %v672 = vmul.f32 %v671, 1.442695
    %v673 = vpow.pop %v672
    %v674 = vadd.f32 %v673, 1.0
    %v675 = vrcp.pop %v674
    %v676 = vmul.f32 1.0, %v675
    %v677 = vmul.f32 %v676, 0.0
    %v678 = vadd.f32 %v677, %v556
    %v679 = vld [vmem:[%s320 + $0x8] sm:$0xf]
    %v680 = vunpack.c.l.bf16 %v679
    %v681 = vld [vmem:[#allocation4 + $0x8] sm:$0xf]
    %v682 = vld [vmem:[#allocation4 + $0x18] sm:$0xf]
    %v683 = vld [vmem:[#allocation4 + $0x28] sm:$0xf]
    %v684 = vld [vmem:[#allocation4 + $0x38] sm:$0xf]
    %v685 = vld [vmem:[#allocation4 + $0x48] sm:$0xf]
    %v686 = vld [vmem:[#allocation4 + $0x58] sm:$0xf]
    %v687 = vld [vmem:[#allocation4 + $0x68] sm:$0xf]
    %v688 = vld [vmem:[#allocation4 + $0x78] sm:$0xf]
    %v689 = vld [vmem:[#allocation4 + $0x88] sm:$0xf]
    %v690 = vld [vmem:[#allocation4 + $0x98] sm:$0xf]
    %v691 = vld [vmem:[#allocation4 + $0xa8] sm:$0xf]
    %v692 = vld [vmem:[#allocation4 + $0xb8] sm:$0xf]
    %v693 = vld [vmem:[#allocation4 + $0xc8] sm:$0xf]
    %v694 = vld [vmem:[#allocation4 + $0xd8] sm:$0xf]
    %v695 = vld [vmem:[#allocation4 + $0xe8] sm:$0xf]
    %v696 = vld [vmem:[#allocation4 + $0xf8] sm:$0xf]
    %v713 = vunpack.c.l.b16 %v681
    %v714 = vunpack.c.l.b16 %v682
    %v715 = vunpack.c.l.b16 %v683
    %v716 = vunpack.c.l.b16 %v684
    %v717 = vunpack.c.l.b16 %v685
    %v718 = vunpack.c.l.b16 %v686
    %v719 = vunpack.c.l.b16 %v687
    %v720 = vunpack.c.l.b16 %v688
    %v721 = vunpack.c.l.b16 %v689
    %v722 = vunpack.c.l.b16 %v690
    %v723 = vunpack.c.l.b16 %v691
    %v724 = vunpack.c.l.b16 %v692
    %v725 = vunpack.c.l.b16 %v693
    %v726 = vunpack.c.l.b16 %v694
    %v727 = vunpack.c.l.b16 %v695
    %v728 = vunpack.c.l.b16 %v696
    %v729 = vpack.c.b16 %v714, %v713
    %v730 = vpack.c.b16 %v716, %v715
    %v731 = vpack.c.b16 %v718, %v717
    %v732 = vpack.c.b16 %v720, %v719
    %v733 = vpack.c.b16 %v722, %v721
    %v734 = vpack.c.b16 %v724, %v723
    %v735 = vpack.c.b16 %v726, %v725
    %v736 = vpack.c.b16 %v728, %v727
    %745 = vmatprep.subr.bf16.mxu0 0
    %746 = vmatpush1.bf16.msra.mxu0 %v736
    %747 = vmatprep.subr.bf16.mxu0 0
    %748 = vmatpush1.bf16.msra.mxu0 %v735
    %749 = vmatprep.subr.bf16.mxu0 0
    %750 = vmatpush1.bf16.msra.mxu0 %v734
    %751 = vmatprep.subr.bf16.mxu0 0
    %752 = vmatpush1.bf16.msra.mxu0 %v733
    %753 = vmatprep.subr.bf16.mxu0 0
    %754 = vmatpush1.bf16.msra.mxu0 %v732
    %755 = vmatprep.subr.bf16.mxu0 0
    %756 = vmatpush1.bf16.msra.mxu0 %v731
    %757 = vmatprep.subr.bf16.mxu0 0
    %758 = vmatpush1.bf16.msra.mxu0 %v730
    %759 = vmatprep.subr.bf16.mxu0 0
    %760 = vmatpush1.bf16.msra.mxu0 %v729
    %761 = vmatprep.subr.bf16.mxu0 0
    %762 = vmatpush2.bf16.msra.mxu0 0
    %763 = vmatprep.subr.bf16.mxu0 0
    %764 = vmatpush2.bf16.msra.mxu0 0
    %765 = vmatprep.subr.bf16.mxu0 0
    %766 = vmatpush2.bf16.msra.mxu0 0
    %767 = vmatprep.subr.bf16.mxu0 0
    %768 = vmatpush2.bf16.msra.mxu0 0
    %769 = vmatprep.subr.bf16.mxu0 0
    %770 = vmatpush2.bf16.msra.mxu0 0
    %771 = vmatprep.subr.bf16.mxu0 0
    %772 = vmatpush2.bf16.msra.mxu0 0
    %773 = vmatprep.subr.bf16.mxu0 0
    %774 = vmatpush2.bf16.msra.mxu0 0
    %775 = vmatprep.subr.bf16.mxu0 0
    %776 = vmatpush2.bf16.msra.mxu0 0
    %777 = vmatprep.mubr.bf16.mxu0 0
    %778 = vmatmul.mubr.bf16.gmra.mxu0 0
    %v779 = vpop.f32.mrf.mxu0
    %v780 = vadd.f32 0.0, %v779
    %v781 = vpop.f32.mrf.mxu0
    %v782 = vpop.f32.mrf.mxu0
    %v783 = vpop.f32.mrf.mxu0
    %784 = vdwg.mxu0
    %v786 = vlaneseq
    %v787 = vshrl.u32 %v786, 7
    %v788 = vsub.s32 0, %v787
    %v789 = vrot.slane %v316, %v788
    %v791 = vadd.f32 %v680, %v789
    %v792 = vadd.f32 %v791, %v780
    %v793 = vxor.u32 %v792, 2147483648
    %v794 = vmul.f32 %v793, 1.442695
    %v795 = vpow.pop %v794
    %v796 = vadd.f32 %v795, 1.0
    %v797 = vrcp.pop %v796
    %v798 = vmul.f32 1.0, %v797
    %v799 = vtanh.pop %v678
    %v800 = vmul.f32 %v798, %v799
    %v801 = vpack.c.bf16 %v800, %v800
    %s802 = smul.u32 1, 4
    %s803 = smul.addr %s802, 4
    %s804 = scalar_lea.vmem [#allocation2], %s803
    %v805 = vld [vmem:[%s804] sm:$0xf]
    %v806 = vunpack.c.l.bf16 %v805
    %807 = vmatprep.subr.bf16.mxu0 0
    %808 = vmatpush1.bf16.msra.mxu0 %v378
    %809 = vmatprep.subr.bf16.mxu0 0
    %810 = vmatpush1.bf16.msra.mxu0 %v377
    %811 = vmatprep.subr.bf16.mxu0 0
    %812 = vmatpush1.bf16.msra.mxu0 %v376
    %813 = vmatprep.subr.bf16.mxu0 0
    %814 = vmatpush1.bf16.msra.mxu0 %v375
    %815 = vmatprep.subr.bf16.mxu0 0
    %816 = vmatpush1.bf16.msra.mxu0 %v374
    %817 = vmatprep.subr.bf16.mxu0 0
    %818 = vmatpush1.bf16.msra.mxu0 %v373
    %819 = vmatprep.subr.bf16.mxu0 0
    %820 = vmatpush1.bf16.msra.mxu0 %v372
    %821 = vmatprep.subr.bf16.mxu0 0
    %822 = vmatpush1.bf16.msra.mxu0 %v371
    %823 = vmatprep.subr.bf16.mxu0 0
    %824 = vmatpush2.bf16.msra.mxu0 0
    %825 = vmatprep.subr.bf16.mxu0 0
    %826 = vmatpush2.bf16.msra.mxu0 0
    %827 = vmatprep.subr.bf16.mxu0 0
    %828 = vmatpush2.bf16.msra.mxu0 0
    %829 = vmatprep.subr.bf16.mxu0 0
    %830 = vmatpush2.bf16.msra.mxu0 0
    %831 = vmatprep.subr.bf16.mxu0 0
    %832 = vmatpush2.bf16.msra.mxu0 0
    %833 = vmatprep.subr.bf16.mxu0 0
    %834 = vmatpush2.bf16.msra.mxu0 0
    %835 = vmatprep.subr.bf16.mxu0 0
    %836 = vmatpush2.bf16.msra.mxu0 0
    %837 = vmatprep.subr.bf16.mxu0 0
    %838 = vmatpush2.bf16.msra.mxu0 0
    %839 = vmatprep.mubr.bf16.mxu0 0
    %840 = vmatmul.mubr.bf16.gmra.mxu0 %v801
    %v841 = vpop.f32.mrf.mxu0
    %v842 = vadd.f32 0.0, %v841
    %v843 = vpop.f32.mrf.mxu0
    %v844 = vpop.f32.mrf.mxu0
    %v845 = vpop.f32.mrf.mxu0
    %846 = vdwg.mxu0
    %v847 = vadd.f32 %v806, %v431
    %v848 = vadd.f32 %v847, %v842
    %v849 = vxor.u32 %v848, 2147483648
    %v850 = vmul.f32 %v849, 1.442695
    %v851 = vpow.pop %v850
    %v852 = vadd.f32 %v851, 1.0
    %v853 = vrcp.pop %v852
    %v854 = vmul.f32 1.0, %v853
    %v855 = vld [vmem:[%s804 + $0xc] sm:$0xf]
    %v856 = vunpack.c.l.bf16 %v855
    %857 = vmatprep.subr.bf16.mxu0 0
    %858 = vmatpush1.bf16.msra.mxu0 %v498
    %859 = vmatprep.subr.bf16.mxu0 0
    %860 = vmatpush1.bf16.msra.mxu0 %v497
    %861 = vmatprep.subr.bf16.mxu0 0
    %862 = vmatpush1.bf16.msra.mxu0 %v496
    %863 = vmatprep.subr.bf16.mxu0 0
    %864 = vmatpush1.bf16.msra.mxu0 %v495
    %865 = vmatprep.subr.bf16.mxu0 0
    %866 = vmatpush1.bf16.msra.mxu0 %v494
    %867 = vmatprep.subr.bf16.mxu0 0
    %868 = vmatpush1.bf16.msra.mxu0 %v493
    %869 = vmatprep.subr.bf16.mxu0 0
    %870 = vmatpush1.bf16.msra.mxu0 %v492
    %871 = vmatprep.subr.bf16.mxu0 0
    %872 = vmatpush1.bf16.msra.mxu0 %v491
    %873 = vmatprep.subr.bf16.mxu0 0
    %874 = vmatpush2.bf16.msra.mxu0 0
    %875 = vmatprep.subr.bf16.mxu0 0
    %876 = vmatpush2.bf16.msra.mxu0 0
    %877 = vmatprep.subr.bf16.mxu0 0
    %878 = vmatpush2.bf16.msra.mxu0 0
    %879 = vmatprep.subr.bf16.mxu0 0
    %880 = vmatpush2.bf16.msra.mxu0 0
    %881 = vmatprep.subr.bf16.mxu0 0
    %882 = vmatpush2.bf16.msra.mxu0 0
    %883 = vmatprep.subr.bf16.mxu0 0
    %884 = vmatpush2.bf16.msra.mxu0 0
    %885 = vmatprep.subr.bf16.mxu0 0
    %886 = vmatpush2.bf16.msra.mxu0 0
    %887 = vmatprep.subr.bf16.mxu0 0
    %888 = vmatpush2.bf16.msra.mxu0 0
    %889 = vmatprep.mubr.bf16.mxu0 0
    %890 = vmatmul.mubr.bf16.gmra.mxu0 %v801
    %v891 = vpop.f32.mrf.mxu0
    %v892 = vadd.f32 0.0, %v891
    %v893 = vpop.f32.mrf.mxu0
    %v894 = vpop.f32.mrf.mxu0
    %v895 = vpop.f32.mrf.mxu0
    %896 = vdwg.mxu0
    %v897 = vadd.f32 %v856, %v551
    %v898 = vadd.f32 %v897, %v892
    %v899 = vtanh.pop %v898
    %v900 = vmul.f32 %v854, %v899
    %v901 = vld [vmem:[%s804 + $0x4] sm:$0xf]
    %v902 = vunpack.c.l.bf16 %v901
    %903 = vmatprep.subr.bf16.mxu0 0
    %904 = vmatpush1.bf16.msra.mxu0 %v614
    %905 = vmatprep.subr.bf16.mxu0 0
    %906 = vmatpush1.bf16.msra.mxu0 %v613
    %907 = vmatprep.subr.bf16.mxu0 0
    %908 = vmatpush1.bf16.msra.mxu0 %v612
    %909 = vmatprep.subr.bf16.mxu0 0
    %910 = vmatpush1.bf16.msra.mxu0 %v611
    %911 = vmatprep.subr.bf16.mxu0 0
    %912 = vmatpush1.bf16.msra.mxu0 %v610
    %913 = vmatprep.subr.bf16.mxu0 0
    %914 = vmatpush1.bf16.msra.mxu0 %v609
    %915 = vmatprep.subr.bf16.mxu0 0
    %916 = vmatpush1.bf16.msra.mxu0 %v608
    %917 = vmatprep.subr.bf16.mxu0 0
    %918 = vmatpush1.bf16.msra.mxu0 %v607
    %919 = vmatprep.subr.bf16.mxu0 0
    %920 = vmatpush2.bf16.msra.mxu0 0
    %921 = vmatprep.subr.bf16.mxu0 0
    %922 = vmatpush2.bf16.msra.mxu0 0
    %923 = vmatprep.subr.bf16.mxu0 0
    %924 = vmatpush2.bf16.msra.mxu0 0
    %925 = vmatprep.subr.bf16.mxu0 0
    %926 = vmatpush2.bf16.msra.mxu0 0
    %927 = vmatprep.subr.bf16.mxu0 0
    %928 = vmatpush2.bf16.msra.mxu0 0
    %929 = vmatprep.subr.bf16.mxu0 0
    %930 = vmatpush2.bf16.msra.mxu0 0
    %931 = vmatprep.subr.bf16.mxu0 0
    %932 = vmatpush2.bf16.msra.mxu0 0
    %933 = vmatprep.subr.bf16.mxu0 0
    %934 = vmatpush2.bf16.msra.mxu0 0
    %935 = vmatprep.mubr.bf16.mxu0 0
    %936 = vmatmul.mubr.bf16.gmra.mxu0 %v801
    %v937 = vpop.f32.mrf.mxu0
    %v938 = vadd.f32 0.0, %v937
    %v939 = vpop.f32.mrf.mxu0
    %v940 = vpop.f32.mrf.mxu0
    %v941 = vpop.f32.mrf.mxu0
    %942 = vdwg.mxu0
    %v943 = vadd.f32 %v902, %v667
    %v944 = vadd.f32 %v943, %v938
    %v945 = vxor.u32 %v944, 2147483648
    %v946 = vmul.f32 %v945, 1.442695
    %v947 = vpow.pop %v946
    %v948 = vadd.f32 %v947, 1.0
    %v949 = vrcp.pop %v948
    %v950 = vmul.f32 1.0, %v949
    %v951 = vmul.f32 %v950, %v678
    %v952 = vadd.f32 %v951, %v900
    %v953 = vld [vmem:[%s804 + $0x8] sm:$0xf]
    %v954 = vunpack.c.l.bf16 %v953
    %955 = vmatprep.subr.bf16.mxu0 0
    %956 = vmatpush1.bf16.msra.mxu0 %v736
    %957 = vmatprep.subr.bf16.mxu0 0
    %958 = vmatpush1.bf16.msra.mxu0 %v735
    %959 = vmatprep.subr.bf16.mxu0 0
    %960 = vmatpush1.bf16.msra.mxu0 %v734
    %961 = vmatprep.subr.bf16.mxu0 0
    %962 = vmatpush1.bf16.msra.mxu0 %v733
    %963 = vmatprep.subr.bf16.mxu0 0
    %964 = vmatpush1.bf16.msra.mxu0 %v732
    %965 = vmatprep.subr.bf16.mxu0 0
    %966 = vmatpush1.bf16.msra.mxu0 %v731
    %967 = vmatprep.subr.bf16.mxu0 0
    %968 = vmatpush1.bf16.msra.mxu0 %v730
    %969 = vmatprep.subr.bf16.mxu0 0
    %970 = vmatpush1.bf16.msra.mxu0 %v729
    %971 = vmatprep.subr.bf16.mxu0 0
    %972 = vmatpush2.bf16.msra.mxu0 0
    %973 = vmatprep.subr.bf16.mxu0 0
    %974 = vmatpush2.bf16.msra.mxu0 0
    %975 = vmatprep.subr.bf16.mxu0 0
    %976 = vmatpush2.bf16.msra.mxu0 0
    %977 = vmatprep.subr.bf16.mxu0 0
    %978 = vmatpush2.bf16.msra.mxu0 0
    %979 = vmatprep.subr.bf16.mxu0 0
    %980 = vmatpush2.bf16.msra.mxu0 0
    %981 = vmatprep.subr.bf16.mxu0 0
    %982 = vmatpush2.bf16.msra.mxu0 0
    %983 = vmatprep.subr.bf16.mxu0 0
    %984 = vmatpush2.bf16.msra.mxu0 0
    %985 = vmatprep.subr.bf16.mxu0 0
    %986 = vmatpush2.bf16.msra.mxu0 0
    %987 = vmatprep.mubr.bf16.mxu0 0
    %988 = vmatmul.mubr.bf16.gmra.mxu0 %v801
    %v989 = vpop.f32.mrf.mxu0
    %v990 = vadd.f32 0.0, %v989
    %v991 = vpop.f32.mrf.mxu0
    %v992 = vpop.f32.mrf.mxu0
    %v993 = vpop.f32.mrf.mxu0
    %994 = vdwg.mxu0
    %v995 = vadd.f32 %v954, %v789
    %v996 = vadd.f32 %v995, %v990
    %v997 = vxor.u32 %v996, 2147483648
    %v998 = vmul.f32 %v997, 1.442695
    %v999 = vpow.pop %v998
    %v1000 = vadd.f32 %v999, 1.0
    %v1001 = vrcp.pop %v1000
    %v1002 = vmul.f32 1.0, %v1001
    %v1003 = vtanh.pop %v952
    %v1004 = vmul.f32 %v1002, %v1003
    %v1005 = vpack.c.bf16 %v1004, %v1004
    %s1006 = smul.u32 2, 4
    %s1007 = smul.addr %s1006, 4
    %s1008 = scalar_lea.vmem [#allocation2], %s1007
    %v1009 = vld [vmem:[%s1008] sm:$0xf]
    %v1010 = vunpack.c.l.bf16 %v1009
    %1011 = vmatprep.subr.bf16.mxu0 0
    %1012 = vmatpush1.bf16.msra.mxu0 %v378
    %1013 = vmatprep.subr.bf16.mxu0 0
    %1014 = vmatpush1.bf16.msra.mxu0 %v377
    %1015 = vmatprep.subr.bf16.mxu0 0
    %1016 = vmatpush1.bf16.msra.mxu0 %v376
    %1017 = vmatprep.subr.bf16.mxu0 0
    %1018 = vmatpush1.bf16.msra.mxu0 %v375
    %1019 = vmatprep.subr.bf16.mxu0 0
    %1020 = vmatpush1.bf16.msra.mxu0 %v374
    %1021 = vmatprep.subr.bf16.mxu0 0
    %1022 = vmatpush1.bf16.msra.mxu0 %v373
    %1023 = vmatprep.subr.bf16.mxu0 0
    %1024 = vmatpush1.bf16.msra.mxu0 %v372
    %1025 = vmatprep.subr.bf16.mxu0 0
    %1026 = vmatpush1.bf16.msra.mxu0 %v371
    %1027 = vmatprep.subr.bf16.mxu0 0
    %1028 = vmatpush2.bf16.msra.mxu0 0
    %1029 = vmatprep.subr.bf16.mxu0 0
    %1030 = vmatpush2.bf16.msra.mxu0 0
    %1031 = vmatprep.subr.bf16.mxu0 0
    %1032 = vmatpush2.bf16.msra.mxu0 0
    %1033 = vmatprep.subr.bf16.mxu0 0
    %1034 = vmatpush2.bf16.msra.mxu0 0
    %1035 = vmatprep.subr.bf16.mxu0 0
    %1036 = vmatpush2.bf16.msra.mxu0 0
    %1037 = vmatprep.subr.bf16.mxu0 0
    %1038 = vmatpush2.bf16.msra.mxu0 0
    %1039 = vmatprep.subr.bf16.mxu0 0
    %1040 = vmatpush2.bf16.msra.mxu0 0
    %1041 = vmatprep.subr.bf16.mxu0 0
    %1042 = vmatpush2.bf16.msra.mxu0 0
    %1043 = vmatprep.mubr.bf16.mxu0 0
    %1044 = vmatmul.mubr.bf16.gmra.mxu0 %v1005
    %v1045 = vpop.f32.mrf.mxu0
    %v1046 = vadd.f32 0.0, %v1045
    %v1047 = vpop.f32.mrf.mxu0
    %v1048 = vpop.f32.mrf.mxu0
    %v1049 = vpop.f32.mrf.mxu0
    %1050 = vdwg.mxu0
    %v1051 = vadd.f32 %v1010, %v431
    %v1052 = vadd.f32 %v1051, %v1046
    %v1053 = vxor.u32 %v1052, 2147483648
    %v1054 = vmul.f32 %v1053, 1.442695
    %v1055 = vpow.pop %v1054
    %v1056 = vadd.f32 %v1055, 1.0
    %v1057 = vrcp.pop %v1056
    %v1058 = vmul.f32 1.0, %v1057
    %v1059 = vld [vmem:[%s1008 + $0xc] sm:$0xf]
    %v1060 = vunpack.c.l.bf16 %v1059
    %1061 = vmatprep.subr.bf16.mxu0 0
    %1062 = vmatpush1.bf16.msra.mxu0 %v498
    %1063 = vmatprep.subr.bf16.mxu0 0
    %1064 = vmatpush1.bf16.msra.mxu0 %v497
    %1065 = vmatprep.subr.bf16.mxu0 0
    %1066 = vmatpush1.bf16.msra.mxu0 %v496
    %1067 = vmatprep.subr.bf16.mxu0 0
    %1068 = vmatpush1.bf16.msra.mxu0 %v495
    %1069 = vmatprep.subr.bf16.mxu0 0
    %1070 = vmatpush1.bf16.msra.mxu0 %v494
    %1071 = vmatprep.subr.bf16.mxu0 0
    %1072 = vmatpush1.bf16.msra.mxu0 %v493
    %1073 = vmatprep.subr.bf16.mxu0 0
    %1074 = vmatpush1.bf16.msra.mxu0 %v492
    %1075 = vmatprep.subr.bf16.mxu0 0
    %1076 = vmatpush1.bf16.msra.mxu0 %v491
    %1077 = vmatprep.subr.bf16.mxu0 0
    %1078 = vmatpush2.bf16.msra.mxu0 0
    %1079 = vmatprep.subr.bf16.mxu0 0
    %1080 = vmatpush2.bf16.msra.mxu0 0
    %1081 = vmatprep.subr.bf16.mxu0 0
    %1082 = vmatpush2.bf16.msra.mxu0 0
    %1083 = vmatprep.subr.bf16.mxu0 0
    %1084 = vmatpush2.bf16.msra.mxu0 0
    %1085 = vmatprep.subr.bf16.mxu0 0
    %1086 = vmatpush2.bf16.msra.mxu0 0
    %1087 = vmatprep.subr.bf16.mxu0 0
    %1088 = vmatpush2.bf16.msra.mxu0 0
    %1089 = vmatprep.subr.bf16.mxu0 0
    %1090 = vmatpush2.bf16.msra.mxu0 0
    %1091 = vmatprep.subr.bf16.mxu0 0
    %1092 = vmatpush2.bf16.msra.mxu0 0
    %1093 = vmatprep.mubr.bf16.mxu0 0
    %1094 = vmatmul.mubr.bf16.gmra.mxu0 %v1005
    %v1095 = vpop.f32.mrf.mxu0
    %v1096 = vadd.f32 0.0, %v1095
    %v1097 = vpop.f32.mrf.mxu0
    %v1098 = vpop.f32.mrf.mxu0
    %v1099 = vpop.f32.mrf.mxu0
    %1100 = vdwg.mxu0
    %v1101 = vadd.f32 %v1060, %v551
    %v1102 = vadd.f32 %v1101, %v1096
    %v1103 = vtanh.pop %v1102
    %v1104 = vmul.f32 %v1058, %v1103
    %v1105 = vld [vmem:[%s1008 + $0x4] sm:$0xf]
    %v1106 = vunpack.c.l.bf16 %v1105
    %1107 = vmatprep.subr.bf16.mxu0 0
    %1108 = vmatpush1.bf16.msra.mxu0 %v614
    %1109 = vmatprep.subr.bf16.mxu0 0
    %1110 = vmatpush1.bf16.msra.mxu0 %v613
    %1111 = vmatprep.subr.bf16.mxu0 0
    %1112 = vmatpush1.bf16.msra.mxu0 %v612
    %1113 = vmatprep.subr.bf16.mxu0 0
    %1114 = vmatpush1.bf16.msra.mxu0 %v611
    %1115 = vmatprep.subr.bf16.mxu0 0
    %1116 = vmatpush1.bf16.msra.mxu0 %v610
    %1117 = vmatprep.subr.bf16.mxu0 0
    %1118 = vmatpush1.bf16.msra.mxu0 %v609
    %1119 = vmatprep.subr.bf16.mxu0 0
    %1120 = vmatpush1.bf16.msra.mxu0 %v608
    %1121 = vmatprep.subr.bf16.mxu0 0
    %1122 = vmatpush1.bf16.msra.mxu0 %v607
    %1123 = vmatprep.subr.bf16.mxu0 0
    %1124 = vmatpush2.bf16.msra.mxu0 0
    %1125 = vmatprep.subr.bf16.mxu0 0
    %1126 = vmatpush2.bf16.msra.mxu0 0
    %1127 = vmatprep.subr.bf16.mxu0 0
    %1128 = vmatpush2.bf16.msra.mxu0 0
    %1129 = vmatprep.subr.bf16.mxu0 0
    %1130 = vmatpush2.bf16.msra.mxu0 0
    %1131 = vmatprep.subr.bf16.mxu0 0
    %1132 = vmatpush2.bf16.msra.mxu0 0
    %1133 = vmatprep.subr.bf16.mxu0 0
    %1134 = vmatpush2.bf16.msra.mxu0 0
    %1135 = vmatprep.subr.bf16.mxu0 0
    %1136 = vmatpush2.bf16.msra.mxu0 0
    %1137 = vmatprep.subr.bf16.mxu0 0
    %1138 = vmatpush2.bf16.msra.mxu0 0
    %1139 = vmatprep.mubr.bf16.mxu0 0
    %1140 = vmatmul.mubr.bf16.gmra.mxu0 %v1005
    %v1141 = vpop.f32.mrf.mxu0
    %v1142 = vadd.f32 0.0, %v1141
    %v1143 = vpop.f32.mrf.mxu0
    %v1144 = vpop.f32.mrf.mxu0
    %v1145 = vpop.f32.mrf.mxu0
    %1146 = vdwg.mxu0
    %v1147 = vadd.f32 %v1106, %v667
    %v1148 = vadd.f32 %v1147, %v1142
    %v1149 = vxor.u32 %v1148, 2147483648
    %v1150 = vmul.f32 %v1149, 1.442695
    %v1151 = vpow.pop %v1150
    %v1152 = vadd.f32 %v1151, 1.0
    %v1153 = vrcp.pop %v1152
    %v1154 = vmul.f32 1.0, %v1153
    %v1155 = vmul.f32 %v1154, %v952
    %v1156 = vadd.f32 %v1155, %v1104
    %v1157 = vld [vmem:[%s1008 + $0x8] sm:$0xf]
    %v1158 = vunpack.c.l.bf16 %v1157
    %1159 = vmatprep.subr.bf16.mxu0 0
    %1160 = vmatpush1.bf16.msra.mxu0 %v736
    %1161 = vmatprep.subr.bf16.mxu0 0
    %1162 = vmatpush1.bf16.msra.mxu0 %v735
    %1163 = vmatprep.subr.bf16.mxu0 0
    %1164 = vmatpush1.bf16.msra.mxu0 %v734
    %1165 = vmatprep.subr.bf16.mxu0 0
    %1166 = vmatpush1.bf16.msra.mxu0 %v733
    %1167 = vmatprep.subr.bf16.mxu0 0
    %1168 = vmatpush1.bf16.msra.mxu0 %v732
    %1169 = vmatprep.subr.bf16.mxu0 0
    %1170 = vmatpush1.bf16.msra.mxu0 %v731
    %1171 = vmatprep.subr.bf16.mxu0 0
    %1172 = vmatpush1.bf16.msra.mxu0 %v730
    %1173 = vmatprep.subr.bf16.mxu0 0
    %1174 = vmatpush1.bf16.msra.mxu0 %v729
    %1175 = vmatprep.subr.bf16.mxu0 0
    %1176 = vmatpush2.bf16.msra.mxu0 0
    %1177 = vmatprep.subr.bf16.mxu0 0
    %1178 = vmatpush2.bf16.msra.mxu0 0
    %1179 = vmatprep.subr.bf16.mxu0 0
    %1180 = vmatpush2.bf16.msra.mxu0 0
    %1181 = vmatprep.subr.bf16.mxu0 0
    %1182 = vmatpush2.bf16.msra.mxu0 0
    %1183 = vmatprep.subr.bf16.mxu0 0
    %1184 = vmatpush2.bf16.msra.mxu0 0
    %1185 = vmatprep.subr.bf16.mxu0 0
    %1186 = vmatpush2.bf16.msra.mxu0 0
    %1187 = vmatprep.subr.bf16.mxu0 0
    %1188 = vmatpush2.bf16.msra.mxu0 0
    %1189 = vmatprep.subr.bf16.mxu0 0
    %1190 = vmatpush2.bf16.msra.mxu0 0
    %1191 = vmatprep.mubr.bf16.mxu0 0
    %1192 = vmatmul.mubr.bf16.gmra.mxu0 %v1005
    %v1193 = vpop.f32.mrf.mxu0
    %v1194 = vadd.f32 0.0, %v1193
    %v1195 = vpop.f32.mrf.mxu0
    %v1196 = vpop.f32.mrf.mxu0
    %v1197 = vpop.f32.mrf.mxu0
    %1198 = vdwg.mxu0
    %v1199 = vadd.f32 %v1158, %v789
    %v1200 = vadd.f32 %v1199, %v1194
    %v1201 = vxor.u32 %v1200, 2147483648
    %v1202 = vmul.f32 %v1201, 1.442695
    %v1203 = vpow.pop %v1202
    %v1204 = vadd.f32 %v1203, 1.0
    %v1205 = vrcp.pop %v1204
    %v1206 = vmul.f32 1.0, %v1205
    %v1207 = vtanh.pop %v1156
    %v1208 = vmul.f32 %v1206, %v1207
    %v1209 = vpack.c.bf16 %v1208, %v1208
    %s1210 = smul.u32 3, 4
    %s1211 = smul.addr %s1210, 4
    %s1212 = scalar_lea.vmem [#allocation2], %s1211
    %v1213 = vld [vmem:[%s1212] sm:$0xf]
    %v1214 = vunpack.c.l.bf16 %v1213
    %1215 = vmatprep.subr.bf16.mxu0 0
    %1216 = vmatpush1.bf16.msra.mxu0 %v378
    %1217 = vmatprep.subr.bf16.mxu0 0
    %1218 = vmatpush1.bf16.msra.mxu0 %v377
    %1219 = vmatprep.subr.bf16.mxu0 0
    %1220 = vmatpush1.bf16.msra.mxu0 %v376
    %1221 = vmatprep.subr.bf16.mxu0 0
    %1222 = vmatpush1.bf16.msra.mxu0 %v375
    %1223 = vmatprep.subr.bf16.mxu0 0
    %1224 = vmatpush1.bf16.msra.mxu0 %v374
    %1225 = vmatprep.subr.bf16.mxu0 0
    %1226 = vmatpush1.bf16.msra.mxu0 %v373
    %1227 = vmatprep.subr.bf16.mxu0 0
    %1228 = vmatpush1.bf16.msra.mxu0 %v372
    %1229 = vmatprep.subr.bf16.mxu0 0
    %1230 = vmatpush1.bf16.msra.mxu0 %v371
    %1231 = vmatprep.subr.bf16.mxu0 0
    %1232 = vmatpush2.bf16.msra.mxu0 0
    %1233 = vmatprep.subr.bf16.mxu0 0
    %1234 = vmatpush2.bf16.msra.mxu0 0
    %1235 = vmatprep.subr.bf16.mxu0 0
    %1236 = vmatpush2.bf16.msra.mxu0 0
    %1237 = vmatprep.subr.bf16.mxu0 0
    %1238 = vmatpush2.bf16.msra.mxu0 0
    %1239 = vmatprep.subr.bf16.mxu0 0
    %1240 = vmatpush2.bf16.msra.mxu0 0
    %1241 = vmatprep.subr.bf16.mxu0 0
    %1242 = vmatpush2.bf16.msra.mxu0 0
    %1243 = vmatprep.subr.bf16.mxu0 0
    %1244 = vmatpush2.bf16.msra.mxu0 0
    %1245 = vmatprep.subr.bf16.mxu0 0
    %1246 = vmatpush2.bf16.msra.mxu0 0
    %1247 = vmatprep.mubr.bf16.mxu0 0
    %1248 = vmatmul.mubr.bf16.gmra.mxu0 %v1209
    %v1249 = vpop.f32.mrf.mxu0
    %v1250 = vadd.f32 0.0, %v1249
    %v1251 = vpop.f32.mrf.mxu0
    %v1252 = vpop.f32.mrf.mxu0
    %v1253 = vpop.f32.mrf.mxu0
    %1254 = vdwg.mxu0
    %v1255 = vadd.f32 %v1214, %v431
    %v1256 = vadd.f32 %v1255, %v1250
    %v1257 = vxor.u32 %v1256, 2147483648
    %v1258 = vmul.f32 %v1257, 1.442695
    %v1259 = vpow.pop %v1258
    %v1260 = vadd.f32 %v1259, 1.0
    %v1261 = vrcp.pop %v1260
    %v1262 = vmul.f32 1.0, %v1261
    %v1263 = vld [vmem:[%s1212 + $0xc] sm:$0xf]
    %v1264 = vunpack.c.l.bf16 %v1263
    %1265 = vmatprep.subr.bf16.mxu0 0
    %1266 = vmatpush1.bf16.msra.mxu0 %v498
    %1267 = vmatprep.subr.bf16.mxu0 0
    %1268 = vmatpush1.bf16.msra.mxu0 %v497
    %1269 = vmatprep.subr.bf16.mxu0 0
    %1270 = vmatpush1.bf16.msra.mxu0 %v496
    %1271 = vmatprep.subr.bf16.mxu0 0
    %1272 = vmatpush1.bf16.msra.mxu0 %v495
    %1273 = vmatprep.subr.bf16.mxu0 0
    %1274 = vmatpush1.bf16.msra.mxu0 %v494
    %1275 = vmatprep.subr.bf16.mxu0 0
    %1276 = vmatpush1.bf16.msra.mxu0 %v493
    %1277 = vmatprep.subr.bf16.mxu0 0
    %1278 = vmatpush1.bf16.msra.mxu0 %v492
    %1279 = vmatprep.subr.bf16.mxu0 0
    %1280 = vmatpush1.bf16.msra.mxu0 %v491
    %1281 = vmatprep.subr.bf16.mxu0 0
    %1282 = vmatpush2.bf16.msra.mxu0 0
    %1283 = vmatprep.subr.bf16.mxu0 0
    %1284 = vmatpush2.bf16.msra.mxu0 0
    %1285 = vmatprep.subr.bf16.mxu0 0
    %1286 = vmatpush2.bf16.msra.mxu0 0
    %1287 = vmatprep.subr.bf16.mxu0 0
    %1288 = vmatpush2.bf16.msra.mxu0 0
    %1289 = vmatprep.subr.bf16.mxu0 0
    %1290 = vmatpush2.bf16.msra.mxu0 0
    %1291 = vmatprep.subr.bf16.mxu0 0
    %1292 = vmatpush2.bf16.msra.mxu0 0
    %1293 = vmatprep.subr.bf16.mxu0 0
    %1294 = vmatpush2.bf16.msra.mxu0 0
    %1295 = vmatprep.subr.bf16.mxu0 0
    %1296 = vmatpush2.bf16.msra.mxu0 0
    %1297 = vmatprep.mubr.bf16.mxu0 0
    %1298 = vmatmul.mubr.bf16.gmra.mxu0 %v1209
    %v1299 = vpop.f32.mrf.mxu0
    %v1300 = vadd.f32 0.0, %v1299
    %v1301 = vpop.f32.mrf.mxu0
    %v1302 = vpop.f32.mrf.mxu0
    %v1303 = vpop.f32.mrf.mxu0
    %1304 = vdwg.mxu0
    %v1305 = vadd.f32 %v1264, %v551
    %v1306 = vadd.f32 %v1305, %v1300
    %v1307 = vtanh.pop %v1306
    %v1308 = vmul.f32 %v1262, %v1307
    %v1309 = vld [vmem:[%s1212 + $0x4] sm:$0xf]
    %v1310 = vunpack.c.l.bf16 %v1309
    %1311 = vmatprep.subr.bf16.mxu0 0
    %1312 = vmatpush1.bf16.msra.mxu0 %v614
    %1313 = vmatprep.subr.bf16.mxu0 0
    %1314 = vmatpush1.bf16.msra.mxu0 %v613
    %1315 = vmatprep.subr.bf16.mxu0 0
    %1316 = vmatpush1.bf16.msra.mxu0 %v612
    %1317 = vmatprep.subr.bf16.mxu0 0
    %1318 = vmatpush1.bf16.msra.mxu0 %v611
    %1319 = vmatprep.subr.bf16.mxu0 0
    %1320 = vmatpush1.bf16.msra.mxu0 %v610
    %1321 = vmatprep.subr.bf16.mxu0 0
    %1322 = vmatpush1.bf16.msra.mxu0 %v609
    %1323 = vmatprep.subr.bf16.mxu0 0
    %1324 = vmatpush1.bf16.msra.mxu0 %v608
    %1325 = vmatprep.subr.bf16.mxu0 0
    %1326 = vmatpush1.bf16.msra.mxu0 %v607
    %1327 = vmatprep.subr.bf16.mxu0 0
    %1328 = vmatpush2.bf16.msra.mxu0 0
    %1329 = vmatprep.subr.bf16.mxu0 0
    %1330 = vmatpush2.bf16.msra.mxu0 0
    %1331 = vmatprep.subr.bf16.mxu0 0
    %1332 = vmatpush2.bf16.msra.mxu0 0
    %1333 = vmatprep.subr.bf16.mxu0 0
    %1334 = vmatpush2.bf16.msra.mxu0 0
    %1335 = vmatprep.subr.bf16.mxu0 0
    %1336 = vmatpush2.bf16.msra.mxu0 0
    %1337 = vmatprep.subr.bf16.mxu0 0
    %1338 = vmatpush2.bf16.msra.mxu0 0
    %1339 = vmatprep.subr.bf16.mxu0 0
    %1340 = vmatpush2.bf16.msra.mxu0 0
    %1341 = vmatprep.subr.bf16.mxu0 0
    %1342 = vmatpush2.bf16.msra.mxu0 0
    %1343 = vmatprep.mubr.bf16.mxu0 0
    %1344 = vmatmul.mubr.bf16.gmra.mxu0 %v1209
    %v1345 = vpop.f32.mrf.mxu0
    %v1346 = vadd.f32 0.0, %v1345
    %v1347 = vpop.f32.mrf.mxu0
    %v1348 = vpop.f32.mrf.mxu0
    %v1349 = vpop.f32.mrf.mxu0
    %1350 = vdwg.mxu0
    %v1351 = vadd.f32 %v1310, %v667
    %v1352 = vadd.f32 %v1351, %v1346
    %v1353 = vxor.u32 %v1352, 2147483648
    %v1354 = vmul.f32 %v1353, 1.442695
    %v1355 = vpow.pop %v1354
    %v1356 = vadd.f32 %v1355, 1.0
    %v1357 = vrcp.pop %v1356
    %v1358 = vmul.f32 1.0, %v1357
    %v1359 = vmul.f32 %v1358, %v1156
    %v1360 = vadd.f32 %v1359, %v1308
    %v1361 = vld [vmem:[%s1212 + $0x8] sm:$0xf]
    %v1362 = vunpack.c.l.bf16 %v1361
    %1363 = vmatprep.subr.bf16.mxu0 0
    %1364 = vmatpush1.bf16.msra.mxu0 %v736
    %1365 = vmatprep.subr.bf16.mxu0 0
    %1366 = vmatpush1.bf16.msra.mxu0 %v735
    %1367 = vmatprep.subr.bf16.mxu0 0
    %1368 = vmatpush1.bf16.msra.mxu0 %v734
    %1369 = vmatprep.subr.bf16.mxu0 0
    %1370 = vmatpush1.bf16.msra.mxu0 %v733
    %1371 = vmatprep.subr.bf16.mxu0 0
    %1372 = vmatpush1.bf16.msra.mxu0 %v732
    %1373 = vmatprep.subr.bf16.mxu0 0
    %1374 = vmatpush1.bf16.msra.mxu0 %v731
    %1375 = vmatprep.subr.bf16.mxu0 0
    %1376 = vmatpush1.bf16.msra.mxu0 %v730
    %1377 = vmatprep.subr.bf16.mxu0 0
    %1378 = vmatpush1.bf16.msra.mxu0 %v729
    %1379 = vmatprep.subr.bf16.mxu0 0
    %1380 = vmatpush2.bf16.msra.mxu0 0
    %1381 = vmatprep.subr.bf16.mxu0 0
    %1382 = vmatpush2.bf16.msra.mxu0 0
    %1383 = vmatprep.subr.bf16.mxu0 0
    %1384 = vmatpush2.bf16.msra.mxu0 0
    %1385 = vmatprep.subr.bf16.mxu0 0
    %1386 = vmatpush2.bf16.msra.mxu0 0
    %1387 = vmatprep.subr.bf16.mxu0 0
    %1388 = vmatpush2.bf16.msra.mxu0 0
    %1389 = vmatprep.subr.bf16.mxu0 0
    %1390 = vmatpush2.bf16.msra.mxu0 0
    %1391 = vmatprep.subr.bf16.mxu0 0
    %1392 = vmatpush2.bf16.msra.mxu0 0
    %1393 = vmatprep.subr.bf16.mxu0 0
    %1394 = vmatpush2.bf16.msra.mxu0 0
    %1395 = vmatprep.mubr.bf16.mxu0 0
    %1396 = vmatmul.mubr.bf16.gmra.mxu0 %v1209
    %v1397 = vpop.f32.mrf.mxu0
    %v1398 = vadd.f32 0.0, %v1397
    %v1399 = vpop.f32.mrf.mxu0
    %v1400 = vpop.f32.mrf.mxu0
    %v1401 = vpop.f32.mrf.mxu0
    %1402 = vdwg.mxu0
    %v1403 = vadd.f32 %v1362, %v789
    %v1404 = vadd.f32 %v1403, %v1398
    %v1405 = vxor.u32 %v1404, 2147483648
    %v1406 = vmul.f32 %v1405, 1.442695
    %v1407 = vpow.pop %v1406
    %v1408 = vadd.f32 %v1407, 1.0
    %v1409 = vrcp.pop %v1408
    %v1410 = vmul.f32 1.0, %v1409
    %v1411 = vtanh.pop %v1360
    %v1412 = vmul.f32 %v1410, %v1411
    %v1413 = vpack.c.bf16 %v1412, %v1412
    %s1414 = smul.u32 4, 4
    %s1415 = smul.addr %s1414, 4
    %s1416 = scalar_lea.vmem [#allocation2], %s1415
    %v1417 = vld [vmem:[%s1416] sm:$0xf]
    %v1418 = vunpack.c.l.bf16 %v1417
    %1419 = vmatprep.subr.bf16.mxu0 0
    %1420 = vmatpush1.bf16.msra.mxu0 %v378
    %1421 = vmatprep.subr.bf16.mxu0 0
    %1422 = vmatpush1.bf16.msra.mxu0 %v377
    %1423 = vmatprep.subr.bf16.mxu0 0
    %1424 = vmatpush1.bf16.msra.mxu0 %v376
    %1425 = vmatprep.subr.bf16.mxu0 0
    %1426 = vmatpush1.bf16.msra.mxu0 %v375
    %1427 = vmatprep.subr.bf16.mxu0 0
    %1428 = vmatpush1.bf16.msra.mxu0 %v374
    %1429 = vmatprep.subr.bf16.mxu0 0
    %1430 = vmatpush1.bf16.msra.mxu0 %v373
    %1431 = vmatprep.subr.bf16.mxu0 0
    %1432 = vmatpush1.bf16.msra.mxu0 %v372
    %1433 = vmatprep.subr.bf16.mxu0 0
    %1434 = vmatpush1.bf16.msra.mxu0 %v371
    %1435 = vmatprep.subr.bf16.mxu0 0
    %1436 = vmatpush2.bf16.msra.mxu0 0
    %1437 = vmatprep.subr.bf16.mxu0 0
    %1438 = vmatpush2.bf16.msra.mxu0 0
    %1439 = vmatprep.subr.bf16.mxu0 0
    %1440 = vmatpush2.bf16.msra.mxu0 0
    %1441 = vmatprep.subr.bf16.mxu0 0
    %1442 = vmatpush2.bf16.msra.mxu0 0
    %1443 = vmatprep.subr.bf16.mxu0 0
    %1444 = vmatpush2.bf16.msra.mxu0 0
    %1445 = vmatprep.subr.bf16.mxu0 0
    %1446 = vmatpush2.bf16.msra.mxu0 0
    %1447 = vmatprep.subr.bf16.mxu0 0
    %1448 = vmatpush2.bf16.msra.mxu0 0
    %1449 = vmatprep.subr.bf16.mxu0 0
    %1450 = vmatpush2.bf16.msra.mxu0 0
    %1451 = vmatprep.mubr.bf16.mxu0 0
    %1452 = vmatmul.mubr.bf16.gmra.mxu0 %v1413
    %v1453 = vpop.f32.mrf.mxu0
    %v1454 = vadd.f32 0.0, %v1453
    %v1455 = vpop.f32.mrf.mxu0
    %v1456 = vpop.f32.mrf.mxu0
    %v1457 = vpop.f32.mrf.mxu0
    %1458 = vdwg.mxu0
    %v1459 = vadd.f32 %v1418, %v431
    %v1460 = vadd.f32 %v1459, %v1454
    %v1461 = vxor.u32 %v1460, 2147483648
    %v1462 = vmul.f32 %v1461, 1.442695
    %v1463 = vpow.pop %v1462
    %v1464 = vadd.f32 %v1463, 1.0
    %v1465 = vrcp.pop %v1464
    %v1466 = vmul.f32 1.0, %v1465
    %v1467 = vld [vmem:[%s1416 + $0xc] sm:$0xf]
    %v1468 = vunpack.c.l.bf16 %v1467
    %1469 = vmatprep.subr.bf16.mxu0 0
    %1470 = vmatpush1.bf16.msra.mxu0 %v498
    %1471 = vmatprep.subr.bf16.mxu0 0
    %1472 = vmatpush1.bf16.msra.mxu0 %v497
    %1473 = vmatprep.subr.bf16.mxu0 0
    %1474 = vmatpush1.bf16.msra.mxu0 %v496
    %1475 = vmatprep.subr.bf16.mxu0 0
    %1476 = vmatpush1.bf16.msra.mxu0 %v495
    %1477 = vmatprep.subr.bf16.mxu0 0
    %1478 = vmatpush1.bf16.msra.mxu0 %v494
    %1479 = vmatprep.subr.bf16.mxu0 0
    %1480 = vmatpush1.bf16.msra.mxu0 %v493
    %1481 = vmatprep.subr.bf16.mxu0 0
    %1482 = vmatpush1.bf16.msra.mxu0 %v492
    %1483 = vmatprep.subr.bf16.mxu0 0
    %1484 = vmatpush1.bf16.msra.mxu0 %v491
    %1485 = vmatprep.subr.bf16.mxu0 0
    %1486 = vmatpush2.bf16.msra.mxu0 0
    %1487 = vmatprep.subr.bf16.mxu0 0
    %1488 = vmatpush2.bf16.msra.mxu0 0
    %1489 = vmatprep.subr.bf16.mxu0 0
    %1490 = vmatpush2.bf16.msra.mxu0 0
    %1491 = vmatprep.subr.bf16.mxu0 0
    %1492 = vmatpush2.bf16.msra.mxu0 0
    %1493 = vmatprep.subr.bf16.mxu0 0
    %1494 = vmatpush2.bf16.msra.mxu0 0
    %1495 = vmatprep.subr.bf16.mxu0 0
    %1496 = vmatpush2.bf16.msra.mxu0 0
    %1497 = vmatprep.subr.bf16.mxu0 0
    %1498 = vmatpush2.bf16.msra.mxu0 0
    %1499 = vmatprep.subr.bf16.mxu0 0
    %1500 = vmatpush2.bf16.msra.mxu0 0
    %1501 = vmatprep.mubr.bf16.mxu0 0
    %1502 = vmatmul.mubr.bf16.gmra.mxu0 %v1413
    %v1503 = vpop.f32.mrf.mxu0
    %v1504 = vadd.f32 0.0, %v1503
    %v1505 = vpop.f32.mrf.mxu0
    %v1506 = vpop.f32.mrf.mxu0
    %v1507 = vpop.f32.mrf.mxu0
    %1508 = vdwg.mxu0
    %v1509 = vadd.f32 %v1468, %v551
    %v1510 = vadd.f32 %v1509, %v1504
    %v1511 = vtanh.pop %v1510
    %v1512 = vmul.f32 %v1466, %v1511
    %v1513 = vld [vmem:[%s1416 + $0x4] sm:$0xf]
    %v1514 = vunpack.c.l.bf16 %v1513
    %1515 = vmatprep.subr.bf16.mxu0 0
    %1516 = vmatpush1.bf16.msra.mxu0 %v614
    %1517 = vmatprep.subr.bf16.mxu0 0
    %1518 = vmatpush1.bf16.msra.mxu0 %v613
    %1519 = vmatprep.subr.bf16.mxu0 0
    %1520 = vmatpush1.bf16.msra.mxu0 %v612
    %1521 = vmatprep.subr.bf16.mxu0 0
    %1522 = vmatpush1.bf16.msra.mxu0 %v611
    %1523 = vmatprep.subr.bf16.mxu0 0
    %1524 = vmatpush1.bf16.msra.mxu0 %v610
    %1525 = vmatprep.subr.bf16.mxu0 0
    %1526 = vmatpush1.bf16.msra.mxu0 %v609
    %1527 = vmatprep.subr.bf16.mxu0 0
    %1528 = vmatpush1.bf16.msra.mxu0 %v608
    %1529 = vmatprep.subr.bf16.mxu0 0
    %1530 = vmatpush1.bf16.msra.mxu0 %v607
    %1531 = vmatprep.subr.bf16.mxu0 0
    %1532 = vmatpush2.bf16.msra.mxu0 0
    %1533 = vmatprep.subr.bf16.mxu0 0
    %1534 = vmatpush2.bf16.msra.mxu0 0
    %1535 = vmatprep.subr.bf16.mxu0 0
    %1536 = vmatpush2.bf16.msra.mxu0 0
    %1537 = vmatprep.subr.bf16.mxu0 0
    %1538 = vmatpush2.bf16.msra.mxu0 0
    %1539 = vmatprep.subr.bf16.mxu0 0
    %1540 = vmatpush2.bf16.msra.mxu0 0
    %1541 = vmatprep.subr.bf16.mxu0 0
    %1542 = vmatpush2.bf16.msra.mxu0 0
    %1543 = vmatprep.subr.bf16.mxu0 0
    %1544 = vmatpush2.bf16.msra.mxu0 0
    %1545 = vmatprep.subr.bf16.mxu0 0
    %1546 = vmatpush2.bf16.msra.mxu0 0
    %1547 = vmatprep.mubr.bf16.mxu0 0
    %1548 = vmatmul.mubr.bf16.gmra.mxu0 %v1413
    %v1549 = vpop.f32.mrf.mxu0
    %v1550 = vadd.f32 0.0, %v1549
    %v1551 = vpop.f32.mrf.mxu0
    %v1552 = vpop.f32.mrf.mxu0
    %v1553 = vpop.f32.mrf.mxu0
    %1554 = vdwg.mxu0
    %v1555 = vadd.f32 %v1514, %v667
    %v1556 = vadd.f32 %v1555, %v1550
    %v1557 = vxor.u32 %v1556, 2147483648
    %v1558 = vmul.f32 %v1557, 1.442695
    %v1559 = vpow.pop %v1558
    %v1560 = vadd.f32 %v1559, 1.0
    %v1561 = vrcp.pop %v1560
    %v1562 = vmul.f32 1.0, %v1561
    %v1563 = vmul.f32 %v1562, %v1360
    %v1564 = vadd.f32 %v1563, %v1512
    %v1565 = vld [vmem:[%s1416 + $0x8] sm:$0xf]
    %v1566 = vunpack.c.l.bf16 %v1565
    %1567 = vmatprep.subr.bf16.mxu0 0
    %1568 = vmatpush1.bf16.msra.mxu0 %v736
    %1569 = vmatprep.subr.bf16.mxu0 0
    %1570 = vmatpush1.bf16.msra.mxu0 %v735
    %1571 = vmatprep.subr.bf16.mxu0 0
    %1572 = vmatpush1.bf16.msra.mxu0 %v734
    %1573 = vmatprep.subr.bf16.mxu0 0
    %1574 = vmatpush1.bf16.msra.mxu0 %v733
    %1575 = vmatprep.subr.bf16.mxu0 0
    %1576 = vmatpush1.bf16.msra.mxu0 %v732
    %1577 = vmatprep.subr.bf16.mxu0 0
    %1578 = vmatpush1.bf16.msra.mxu0 %v731
    %1579 = vmatprep.subr.bf16.mxu0 0
    %1580 = vmatpush1.bf16.msra.mxu0 %v730
    %1581 = vmatprep.subr.bf16.mxu0 0
    %1582 = vmatpush1.bf16.msra.mxu0 %v729
    %1583 = vmatprep.subr.bf16.mxu0 0
    %1584 = vmatpush2.bf16.msra.mxu0 0
    %1585 = vmatprep.subr.bf16.mxu0 0
    %1586 = vmatpush2.bf16.msra.mxu0 0
    %1587 = vmatprep.subr.bf16.mxu0 0
    %1588 = vmatpush2.bf16.msra.mxu0 0
    %1589 = vmatprep.subr.bf16.mxu0 0
    %1590 = vmatpush2.bf16.msra.mxu0 0
    %1591 = vmatprep.subr.bf16.mxu0 0
    %1592 = vmatpush2.bf16.msra.mxu0 0
    %1593 = vmatprep.subr.bf16.mxu0 0
    %1594 = vmatpush2.bf16.msra.mxu0 0
    %1595 = vmatprep.subr.bf16.mxu0 0
    %1596 = vmatpush2.bf16.msra.mxu0 0
    %1597 = vmatprep.subr.bf16.mxu0 0
    %1598 = vmatpush2.bf16.msra.mxu0 0
    %1599 = vmatprep.mubr.bf16.mxu0 0
    %1600 = vmatmul.mubr.bf16.gmra.mxu0 %v1413
    %v1601 = vpop.f32.mrf.mxu0
    %v1602 = vadd.f32 0.0, %v1601
    %v1603 = vpop.f32.mrf.mxu0
    %v1604 = vpop.f32.mrf.mxu0
    %v1605 = vpop.f32.mrf.mxu0
    %1606 = vdwg.mxu0
    %v1607 = vadd.f32 %v1566, %v789
    %v1608 = vadd.f32 %v1607, %v1602
    %v1609 = vxor.u32 %v1608, 2147483648
    %v1610 = vmul.f32 %v1609, 1.442695
    %v1611 = vpow.pop %v1610
    %v1612 = vadd.f32 %v1611, 1.0
    %v1613 = vrcp.pop %v1612
    %v1614 = vmul.f32 1.0, %v1613
    %v1615 = vtanh.pop %v1564
    %v1616 = vmul.f32 %v1614, %v1615
    %v1617 = vpack.c.bf16 %v1616, %v1616
    %s1618 = smul.u32 5, 4
    %s1619 = smul.addr %s1618, 4
    %s1620 = scalar_lea.vmem [#allocation2], %s1619
    %v1621 = vld [vmem:[%s1620] sm:$0xf]
    %v1622 = vunpack.c.l.bf16 %v1621
    %1623 = vmatprep.subr.bf16.mxu0 0
    %1624 = vmatpush1.bf16.msra.mxu0 %v378
    %1625 = vmatprep.subr.bf16.mxu0 0
    %1626 = vmatpush1.bf16.msra.mxu0 %v377
    %1627 = vmatprep.subr.bf16.mxu0 0
    %1628 = vmatpush1.bf16.msra.mxu0 %v376
    %1629 = vmatprep.subr.bf16.mxu0 0
    %1630 = vmatpush1.bf16.msra.mxu0 %v375
    %1631 = vmatprep.subr.bf16.mxu0 0
    %1632 = vmatpush1.bf16.msra.mxu0 %v374
    %1633 = vmatprep.subr.bf16.mxu0 0
    %1634 = vmatpush1.bf16.msra.mxu0 %v373
    %1635 = vmatprep.subr.bf16.mxu0 0
    %1636 = vmatpush1.bf16.msra.mxu0 %v372
    %1637 = vmatprep.subr.bf16.mxu0 0
    %1638 = vmatpush1.bf16.msra.mxu0 %v371
    %1639 = vmatprep.subr.bf16.mxu0 0
    %1640 = vmatpush2.bf16.msra.mxu0 0
    %1641 = vmatprep.subr.bf16.mxu0 0
    %1642 = vmatpush2.bf16.msra.mxu0 0
    %1643 = vmatprep.subr.bf16.mxu0 0
    %1644 = vmatpush2.bf16.msra.mxu0 0
    %1645 = vmatprep.subr.bf16.mxu0 0
    %1646 = vmatpush2.bf16.msra.mxu0 0
    %1647 = vmatprep.subr.bf16.mxu0 0
    %1648 = vmatpush2.bf16.msra.mxu0 0
    %1649 = vmatprep.subr.bf16.mxu0 0
    %1650 = vmatpush2.bf16.msra.mxu0 0
    %1651 = vmatprep.subr.bf16.mxu0 0
    %1652 = vmatpush2.bf16.msra.mxu0 0
    %1653 = vmatprep.subr.bf16.mxu0 0
    %1654 = vmatpush2.bf16.msra.mxu0 0
    %1655 = vmatprep.mubr.bf16.mxu0 0
    %1656 = vmatmul.mubr.bf16.gmra.mxu0 %v1617
    %v1657 = vpop.f32.mrf.mxu0
    %v1658 = vadd.f32 0.0, %v1657
    %v1659 = vpop.f32.mrf.mxu0
    %v1660 = vpop.f32.mrf.mxu0
    %v1661 = vpop.f32.mrf.mxu0
    %1662 = vdwg.mxu0
    %v1663 = vadd.f32 %v1622, %v431
    %v1664 = vadd.f32 %v1663, %v1658
    %v1665 = vxor.u32 %v1664, 2147483648
    %v1666 = vmul.f32 %v1665, 1.442695
    %v1667 = vpow.pop %v1666
    %v1668 = vadd.f32 %v1667, 1.0
    %v1669 = vrcp.pop %v1668
    %v1670 = vmul.f32 1.0, %v1669
    %v1671 = vld [vmem:[%s1620 + $0xc] sm:$0xf]
    %v1672 = vunpack.c.l.bf16 %v1671
    %1673 = vmatprep.subr.bf16.mxu0 0
    %1674 = vmatpush1.bf16.msra.mxu0 %v498
    %1675 = vmatprep.subr.bf16.mxu0 0
    %1676 = vmatpush1.bf16.msra.mxu0 %v497
    %1677 = vmatprep.subr.bf16.mxu0 0
    %1678 = vmatpush1.bf16.msra.mxu0 %v496
    %1679 = vmatprep.subr.bf16.mxu0 0
    %1680 = vmatpush1.bf16.msra.mxu0 %v495
    %1681 = vmatprep.subr.bf16.mxu0 0
    %1682 = vmatpush1.bf16.msra.mxu0 %v494
    %1683 = vmatprep.subr.bf16.mxu0 0
    %1684 = vmatpush1.bf16.msra.mxu0 %v493
    %1685 = vmatprep.subr.bf16.mxu0 0
    %1686 = vmatpush1.bf16.msra.mxu0 %v492
    %1687 = vmatprep.subr.bf16.mxu0 0
    %1688 = vmatpush1.bf16.msra.mxu0 %v491
    %1689 = vmatprep.subr.bf16.mxu0 0
    %1690 = vmatpush2.bf16.msra.mxu0 0
    %1691 = vmatprep.subr.bf16.mxu0 0
    %1692 = vmatpush2.bf16.msra.mxu0 0
    %1693 = vmatprep.subr.bf16.mxu0 0
    %1694 = vmatpush2.bf16.msra.mxu0 0
    %1695 = vmatprep.subr.bf16.mxu0 0
    %1696 = vmatpush2.bf16.msra.mxu0 0
    %1697 = vmatprep.subr.bf16.mxu0 0
    %1698 = vmatpush2.bf16.msra.mxu0 0
    %1699 = vmatprep.subr.bf16.mxu0 0
    %1700 = vmatpush2.bf16.msra.mxu0 0
    %1701 = vmatprep.subr.bf16.mxu0 0
    %1702 = vmatpush2.bf16.msra.mxu0 0
    %1703 = vmatprep.subr.bf16.mxu0 0
    %1704 = vmatpush2.bf16.msra.mxu0 0
    %1705 = vmatprep.mubr.bf16.mxu0 0
    %1706 = vmatmul.mubr.bf16.gmra.mxu0 %v1617
    %v1707 = vpop.f32.mrf.mxu0
    %v1708 = vadd.f32 0.0, %v1707
    %v1709 = vpop.f32.mrf.mxu0
    %v1710 = vpop.f32.mrf.mxu0
    %v1711 = vpop.f32.mrf.mxu0
    %1712 = vdwg.mxu0
    %v1713 = vadd.f32 %v1672, %v551
    %v1714 = vadd.f32 %v1713, %v1708
    %v1715 = vtanh.pop %v1714
    %v1716 = vmul.f32 %v1670, %v1715
    %v1717 = vld [vmem:[%s1620 + $0x4] sm:$0xf]
    %v1718 = vunpack.c.l.bf16 %v1717
    %1719 = vmatprep.subr.bf16.mxu0 0
    %1720 = vmatpush1.bf16.msra.mxu0 %v614
    %1721 = vmatprep.subr.bf16.mxu0 0
    %1722 = vmatpush1.bf16.msra.mxu0 %v613
    %1723 = vmatprep.subr.bf16.mxu0 0
    %1724 = vmatpush1.bf16.msra.mxu0 %v612
    %1725 = vmatprep.subr.bf16.mxu0 0
    %1726 = vmatpush1.bf16.msra.mxu0 %v611
    %1727 = vmatprep.subr.bf16.mxu0 0
    %1728 = vmatpush1.bf16.msra.mxu0 %v610
    %1729 = vmatprep.subr.bf16.mxu0 0
    %1730 = vmatpush1.bf16.msra.mxu0 %v609
    %1731 = vmatprep.subr.bf16.mxu0 0
    %1732 = vmatpush1.bf16.msra.mxu0 %v608
    %1733 = vmatprep.subr.bf16.mxu0 0
    %1734 = vmatpush1.bf16.msra.mxu0 %v607
    %1735 = vmatprep.subr.bf16.mxu0 0
    %1736 = vmatpush2.bf16.msra.mxu0 0
    %1737 = vmatprep.subr.bf16.mxu0 0
    %1738 = vmatpush2.bf16.msra.mxu0 0
    %1739 = vmatprep.subr.bf16.mxu0 0
    %1740 = vmatpush2.bf16.msra.mxu0 0
    %1741 = vmatprep.subr.bf16.mxu0 0
    %1742 = vmatpush2.bf16.msra.mxu0 0
    %1743 = vmatprep.subr.bf16.mxu0 0
    %1744 = vmatpush2.bf16.msra.mxu0 0
    %1745 = vmatprep.subr.bf16.mxu0 0
    %1746 = vmatpush2.bf16.msra.mxu0 0
    %1747 = vmatprep.subr.bf16.mxu0 0
    %1748 = vmatpush2.bf16.msra.mxu0 0
    %1749 = vmatprep.subr.bf16.mxu0 0
    %1750 = vmatpush2.bf16.msra.mxu0 0
    %1751 = vmatprep.mubr.bf16.mxu0 0
    %1752 = vmatmul.mubr.bf16.gmra.mxu0 %v1617
    %v1753 = vpop.f32.mrf.mxu0
    %v1754 = vadd.f32 0.0, %v1753
    %v1755 = vpop.f32.mrf.mxu0
    %v1756 = vpop.f32.mrf.mxu0
    %v1757 = vpop.f32.mrf.mxu0
    %1758 = vdwg.mxu0
    %v1759 = vadd.f32 %v1718, %v667
    %v1760 = vadd.f32 %v1759, %v1754
    %v1761 = vxor.u32 %v1760, 2147483648
    %v1762 = vmul.f32 %v1761, 1.442695
    %v1763 = vpow.pop %v1762
    %v1764 = vadd.f32 %v1763, 1.0
    %v1765 = vrcp.pop %v1764
    %v1766 = vmul.f32 1.0, %v1765
    %v1767 = vmul.f32 %v1766, %v1564
    %v1768 = vadd.f32 %v1767, %v1716
    %v1769 = vld [vmem:[%s1620 + $0x8] sm:$0xf]
    %v1770 = vunpack.c.l.bf16 %v1769
    %1771 = vmatprep.subr.bf16.mxu0 0
    %1772 = vmatpush1.bf16.msra.mxu0 %v736
    %1773 = vmatprep.subr.bf16.mxu0 0
    %1774 = vmatpush1.bf16.msra.mxu0 %v735
    %1775 = vmatprep.subr.bf16.mxu0 0
    %1776 = vmatpush1.bf16.msra.mxu0 %v734
    %1777 = vmatprep.subr.bf16.mxu0 0
    %1778 = vmatpush1.bf16.msra.mxu0 %v733
    %1779 = vmatprep.subr.bf16.mxu0 0
    %1780 = vmatpush1.bf16.msra.mxu0 %v732
    %1781 = vmatprep.subr.bf16.mxu0 0
    %1782 = vmatpush1.bf16.msra.mxu0 %v731
    %1783 = vmatprep.subr.bf16.mxu0 0
    %1784 = vmatpush1.bf16.msra.mxu0 %v730
    %1785 = vmatprep.subr.bf16.mxu0 0
    %1786 = vmatpush1.bf16.msra.mxu0 %v729
    %1787 = vmatprep.subr.bf16.mxu0 0
    %1788 = vmatpush2.bf16.msra.mxu0 0
    %1789 = vmatprep.subr.bf16.mxu0 0
    %1790 = vmatpush2.bf16.msra.mxu0 0
    %1791 = vmatprep.subr.bf16.mxu0 0
    %1792 = vmatpush2.bf16.msra.mxu0 0
    %1793 = vmatprep.subr.bf16.mxu0 0
    %1794 = vmatpush2.bf16.msra.mxu0 0
    %1795 = vmatprep.subr.bf16.mxu0 0
    %1796 = vmatpush2.bf16.msra.mxu0 0
    %1797 = vmatprep.subr.bf16.mxu0 0
    %1798 = vmatpush2.bf16.msra.mxu0 0
    %1799 = vmatprep.subr.bf16.mxu0 0
    %1800 = vmatpush2.bf16.msra.mxu0 0
    %1801 = vmatprep.subr.bf16.mxu0 0
    %1802 = vmatpush2.bf16.msra.mxu0 0
    %1803 = vmatprep.mubr.bf16.mxu0 0
    %1804 = vmatmul.mubr.bf16.gmra.mxu0 %v1617
    %v1805 = vpop.f32.mrf.mxu0
    %v1806 = vadd.f32 0.0, %v1805
    %v1807 = vpop.f32.mrf.mxu0
    %v1808 = vpop.f32.mrf.mxu0
    %v1809 = vpop.f32.mrf.mxu0
    %1810 = vdwg.mxu0
    %v1811 = vadd.f32 %v1770, %v789
    %v1812 = vadd.f32 %v1811, %v1806
    %v1813 = vxor.u32 %v1812, 2147483648
    %v1814 = vmul.f32 %v1813, 1.442695
    %v1815 = vpow.pop %v1814
    %v1816 = vadd.f32 %v1815, 1.0
    %v1817 = vrcp.pop %v1816
    %v1818 = vmul.f32 1.0, %v1817
    %v1819 = vtanh.pop %v1768
    %v1820 = vmul.f32 %v1818, %v1819
    %v1821 = vld [vmem:[%s4] sm:$0x1]
    %v1823 = vlaneseq
    %v1824 = vshrl.u32 %v1823, 7
    %v1825 = vsub.s32 0, %v1824
    %v1826 = vrot.slane %v1821, %v1825
    %v1828 = vmul.f32 %v1820, %v1826
    %1829 = vadd.xlane.f32.xlu0 %v1828
    %v1830 = vpop.xlane.xlu0 %1829
    %v1831 = vld [vmem:[#allocation3] sm:$0x1]
    %v1833 = vlaneseq
    %v1834 = vshrl.u32 %v1833, 7
    %v1835 = vsub.s32 0, %v1834
    %v1836 = vrot.slane %v1831, %v1835
    %v1838 = vadd.f32 %v1830, %v1836
    %vm1839 = vcmask 7168
    %1840 = vst.msk [vmem:[%s6] sm:$0xff] %vm1839, %v1838
    // Predicated region
    $region30: #{tpu_custom_call.1} parent=1 // pred_check
      _
    $region31: #{tpu_custom_call.1} parent=1 // pred_check_branch
      %1842 = sbr.rel (0) target = $region33
    $region32: #{tpu_custom_call.1} parent=1 // pred_region
      _
    $region33: #{tpu_custom_call.1} parent=1 // pred_fallthru
      _
    // Predicated region
    $region34: #{tpu_custom_call.1} parent=1 // pred_check
      _
    $region35: #{tpu_custom_call.1} parent=1 // pred_check_branch
      %1844 = sbr.rel (0) target = $region37
    $region36: #{tpu_custom_call.1} parent=1 // pred_region
      _
    $region37: #{tpu_custom_call.1} parent=1 // pred_fallthru
      _
    %1845 = vsyncpa [#allocation5], 1

</llo_original>
